<compile_context>
chip_gen: v7x
topology: tpu7x:2x2x1
jax: 0.10.0
libtpu: 0.0.40
codegen_flags: <defaults>
</compile_context>

<pallas_src>
import math
import functools

import jax
import jax.numpy as jnp
from jax import lax
from jax.experimental import pallas as pl
from jax.experimental.pallas import tpu as pltpu


# ---------------------------------------------------------------------------
# Fused attention kernel: QKV projection + softmax attention + output proj
# ---------------------------------------------------------------------------
def _fused_attention_kernel(x_ref, wqkv_ref, wout_ref, bout_ref, o_ref, *,
                            heads, scale):
    # x_ref: (N, D)   wqkv_ref: (D, 3*inner)   wout_ref: (inner, D)
    # bout_ref: (1, D)   o_ref: (N, D)
    inner = wout_ref.shape[0]
    dh = inner // heads

    # ---- QKV projection (bias-free); bf16 MXU inputs, f32 accumulation ----
    x = x_ref[...].astype(jnp.bfloat16)
    wqkv = wqkv_ref[...].astype(jnp.bfloat16)
    qkv = jnp.dot(x, wqkv, preferred_element_type=jnp.float32)       # (N, 3*inner)

    q = qkv[:, :inner] * scale          # fold softmax scale into q (N*dh work)
    k = qkv[:, inner:2 * inner]
    v = qkv[:, 2 * inner:]

    # ---- per-head softmax(q k^T) v; heads unrolled (static trip count) ----
    ctx_heads = []
    for h in range(heads):
        lo = h * dh
        qh = q[:, lo:lo + dh].astype(jnp.bfloat16)                   # (N, dh)
        kh = k[:, lo:lo + dh].astype(jnp.bfloat16)                   # (N, dh)
        vh = v[:, lo:lo + dh].astype(jnp.bfloat16)                   # (N, dh)
        # scores = q_h @ k_h^T (contract last dims directly, no transpose op)
        s = lax.dot_general(qh, kh, (((1,), (1,)), ((), ())),
                            preferred_element_type=jnp.float32)      # (N, N)
        m = jnp.max(s, axis=-1, keepdims=True)
        e = jnp.exp(s - m)
        p = e * pl.reciprocal(jnp.sum(e, axis=-1, keepdims=True), approx=True)
        ctx_heads.append(jnp.dot(p.astype(jnp.bfloat16), vh,
                                 preferred_element_type=jnp.float32))  # (N, dh)

    # 'b h n d -> b n (h d)': concatenating heads along lanes gives (N, inner)
    # already in the layout the output projection (and o_ref) expects.
    ctx = jnp.concatenate(ctx_heads, axis=-1).astype(jnp.bfloat16)

    # ---- output projection: Linear(inner, dim) + Dropout(p=0.0) == identity ----
    y = jnp.dot(ctx, wout_ref[...].astype(jnp.bfloat16),
                preferred_element_type=jnp.float32) + bout_ref[...]
    o_ref[...] = y.astype(o_ref.dtype)


def attention_forward(x, w_qkv_t, w_out_t, b_out, *, heads):
    """Forward pass matching the PyTorch `Attention` module.

    x:        (B, N, dim)     float32
    w_qkv_t:  (dim, 3*inner)  = to_qkv.weight.T   (bias-free)
    w_out_t:  (inner, dim)    = to_out[0].weight.T
    b_out:    (dim,)          = to_out[0].bias
    returns   (B, N, dim)     float32
    """
    B, N, D = x.shape
    inner = w_qkv_t.shape[1] // 3
    dh = inner // heads
    assert dh * heads == inner and w_out_t.shape == (inner, D)
    scale = float(dh) ** -0.5

    kernel = functools.partial(_fused_attention_kernel, heads=heads, scale=scale)
    return pl.pallas_call(
        kernel,
        out_shape=jax.ShapeDtypeStruct((B, N, D), x.dtype),
        grid_spec=pltpu.PrefetchScalarGridSpec(
            num_scalar_prefetch=0,
            grid=(B,),
            in_specs=[
                # One batch element per grid step; leading dim squeezed so the
                # kernel works on clean 2-D (N, D) tiles.
                pl.BlockSpec((None, N, D), lambda b: (b, 0, 0)),
                # Grid-invariant weights / bias kept VMEM-resident.
                # (On v7x these could additionally be single-buffered with
                #  pipeline_mode=pl.Buffered(1); footprint here is negligible.)
                pl.BlockSpec((D, 3 * inner), lambda b: (0, 0)),
                pl.BlockSpec((inner, D), lambda b: (0, 0)),
                pl.BlockSpec((1, D), lambda b: (0, 0)),
            ],
            out_specs=pl.BlockSpec((None, N, D), lambda b: (b, 0, 0)),
        ),
        compiler_params=pltpu.CompilerParams(
            dimension_semantics=("parallel",),   # batches split across TCs (v7x)
        ),
    )(x, w_qkv_t, w_out_t, b_out.reshape(1, D))


# ---------------------------------------------------------------------------
# Pure-JAX reference (exact f32) + demo
# ---------------------------------------------------------------------------
def attention_ref(x, w_qkv_t, w_out_t, b_out, heads):
    B, N, D = x.shape
    inner = w_qkv_t.shape[1] // 3
    dh = inner // heads
    hi = lax.Precision.HIGHEST
    qkv = jnp.dot(x, w_qkv_t, precision=hi)
    q, k, v = jnp.split(qkv, 3, axis=-1)

    def to_heads(t):
        return t.reshape(B, N, heads, dh).transpose(0, 2, 1, 3)

    q, k, v = map(to_heads, (q, k, v))
    dots = jnp.einsum('bhid,bhjd->bhij', q, k, precision=hi) * (dh ** -0.5)
    attn = jax.nn.softmax(dots, axis=-1)
    out = jnp.einsum('bhij,bhjd->bhid', attn, v, precision=hi)
    out = out.transpose(0, 2, 1, 3).reshape(B, N, inner)
    return (jnp.dot(out, w_out_t, precision=hi) + b_out).reshape(B, N, D)


def init_params(key, dim, heads):
    """Deterministic synthetic init mimicking the PyTorch module's init."""
    dh = dim // heads
    inner = dh * heads
    k1, k2, k3 = jax.random.split(key, 3)
    # to_qkv: xavier_uniform on weight of shape (3*inner, dim); store transposed.
    bound_qkv = math.sqrt(6.0 / (dim + 3 * inner))
    w_qkv = jax.random.uniform(k1, (3 * inner, dim), jnp.float32, -bound_qkv, bound_qkv)
    # to_out Linear(inner, dim): PyTorch default uniform(-1/sqrt(inner), +1/sqrt(inner)).
    bound_out = 1.0 / math.sqrt(inner)
    w_out = jax.random.uniform(k2, (dim, inner), jnp.float32, -bound_out, bound_out)
    b_out = jax.random.uniform(k3, (dim,), jnp.float32, -bound_out, bound_out)
    return w_qkv.T, w_out.T, b_out


if __name__ == "__main__":
    key = jax.random.PRNGKey(0)
    kx, kp = jax.random.split(key)

    batch, seq, dim, heads = 2, 16, 64, 8
    x = jax.random.normal(kx, (batch, seq, dim), jnp.float32)
    w_qkv_t, w_out_t, b_out = init_params(kp, dim, heads)

    fwd = jax.jit(functools.partial(attention_forward, heads=heads))
    y = jax.block_until_ready(fwd(x, w_qkv_t, w_out_t, b_out))

    y_ref = attention_ref(x, w_qkv_t, w_out_t, b_out, heads)
    assert y.shape == (batch, seq, dim)
    err = float(jnp.max(jnp.abs(y - y_ref)))
    # Tolerance accommodates bf16 MXU inputs / approx reciprocal vs exact f32 ref.
    assert jnp.allclose(y, y_ref, atol=2e-2, rtol=2e-2), err

    print("KERNEL_OK")
</pallas_src>

<mosaic_0001>
module attributes {stable_mosaic.version = 11 : i64} {
  func.func @_fused_attention_kernel(%arg0: i32, %arg1: memref<1x16x64xf32, #tpu.memory_space<vmem>>, %arg2: memref<64x192xf32, #tpu.memory_space<vmem>>, %arg3: memref<64x64xf32, #tpu.memory_space<vmem>>, %arg4: memref<1x64xf32, #tpu.memory_space<vmem>>, %arg5: memref<1x16x64xf32, #tpu.memory_space<vmem>>) attributes {dimension_semantics = [#tpu.dimension_semantics<parallel>], iteration_bounds = array<i64: 2>, scalar_prefetch = 0 : i64, scratch_operands = 0 : i64, tpu.core_type = #tpu.core_type<tc>, window_params = [{transform_indices = @transform_0, window_bounds = array<i64: 1, 16, 64>}, {pipeline_mode = #tpu.pipeline_mode<synchronous>, transform_indices = @transform_1, window_bounds = array<i64: 64, 192>}, {pipeline_mode = #tpu.pipeline_mode<synchronous>, transform_indices = @transform_2, window_bounds = array<i64: 64, 64>}, {pipeline_mode = #tpu.pipeline_mode<synchronous>, transform_indices = @transform_3, window_bounds = array<i64: 1, 64>}, {transform_indices = @transform_4, window_bounds = array<i64: 1, 16, 64>}]} {
    %c0 = arith.constant 0 : index
    %c0_0 = arith.constant 0 : index
    %c0_1 = arith.constant 0 : index
    %0 = vector.load %arg1[%c0, %c0_0, %c0_1] : memref<1x16x64xf32, #tpu.memory_space<vmem>>, vector<1x16x64xf32>
    %1 = vector.shape_cast %0 : vector<1x16x64xf32> to vector<16x64xf32>
    %2 = arith.truncf %1 : vector<16x64xf32> to vector<16x64xbf16>
    %c0_2 = arith.constant 0 : index
    %c0_3 = arith.constant 0 : index
    %3 = vector.load %arg2[%c0_2, %c0_3] : memref<64x192xf32, #tpu.memory_space<vmem>>, vector<64x192xf32>
    %4 = arith.truncf %3 : vector<64x192xf32> to vector<64x192xbf16>
    %cst = arith.constant dense<0.000000e+00> : vector<16x192xf32>
    %5 = tpu.matmul %2, %4, %cst {dimension_numbers = #tpu.dot_dimension_numbers<[1], [0], [0], [1], [0, 0, 1, 1], [], []>} : vector<16x64xbf16>, vector<64x192xbf16>, vector<16x192xf32> -> vector<16x192xf32>
    %6 = vector.extract_strided_slice %5 {offsets = [0, 0], sizes = [16, 64], strides = [1, 1]} : vector<16x192xf32> to vector<16x64xf32>
    %cst_4 = arith.constant 0.353553385 : f32
    %7 = vector.broadcast %cst_4 : f32 to vector<16x64xf32>
    %8 = arith.mulf %6, %7 : vector<16x64xf32>
    %9 = vector.extract_strided_slice %5 {offsets = [0, 64], sizes = [16, 64], strides = [1, 1]} : vector<16x192xf32> to vector<16x64xf32>
    %10 = vector.extract_strided_slice %5 {offsets = [0, 128], sizes = [16, 64], strides = [1, 1]} : vector<16x192xf32> to vector<16x64xf32>
    %11 = vector.extract_strided_slice %8 {offsets = [0, 0], sizes = [16, 8], strides = [1, 1]} : vector<16x64xf32> to vector<16x8xf32>
    %12 = arith.truncf %11 : vector<16x8xf32> to vector<16x8xbf16>
    %13 = vector.extract_strided_slice %9 {offsets = [0, 0], sizes = [16, 8], strides = [1, 1]} : vector<16x64xf32> to vector<16x8xf32>
    %14 = arith.truncf %13 : vector<16x8xf32> to vector<16x8xbf16>
    %15 = vector.extract_strided_slice %10 {offsets = [0, 0], sizes = [16, 8], strides = [1, 1]} : vector<16x64xf32> to vector<16x8xf32>
    %16 = arith.truncf %15 : vector<16x8xf32> to vector<16x8xbf16>
    %cst_5 = arith.constant dense<0.000000e+00> : vector<16x16xf32>
    %17 = tpu.matmul %12, %14, %cst_5 {dimension_numbers = #tpu.dot_dimension_numbers<[1], [1], [0], [0], [0, 0, 1, 0], [], []>} : vector<16x8xbf16>, vector<16x8xbf16>, vector<16x16xf32> -> vector<16x16xf32>
    %cst_6 = arith.constant dense<0xFF800000> : vector<16xf32>
    %18 = vector.multi_reduction <maximumf>, %17, %cst_6 [1] : vector<16x16xf32> to vector<16xf32>
    %19 = vector.shape_cast %18 : vector<16xf32> to vector<16x1xf32>
    %20 = vector.broadcast %19 : vector<16x1xf32> to vector<16x16xf32>
    %21 = arith.subf %17, %20 : vector<16x16xf32>
    %22 = math.exp %21 : vector<16x16xf32>
    %cst_7 = arith.constant dense<0.000000e+00> : vector<16xf32>
    %23 = vector.multi_reduction <add>, %22, %cst_7 [1] : vector<16x16xf32> to vector<16xf32>
    %24 = vector.shape_cast %23 : vector<16xf32> to vector<16x1xf32>
    %25 = tpu.reciprocal %24 {approx = true} : vector<16x1xf32> -> vector<16x1xf32>
    %26 = vector.broadcast %25 : vector<16x1xf32> to vector<16x16xf32>
    %27 = arith.mulf %22, %26 : vector<16x16xf32>
    %28 = arith.truncf %27 : vector<16x16xf32> to vector<16x16xbf16>
    %cst_8 = arith.constant dense<0.000000e+00> : vector<16x8xf32>
    %29 = tpu.matmul %28, %16, %cst_8 {dimension_numbers = #tpu.dot_dimension_numbers<[1], [0], [0], [1], [0, 0, 1, 1], [], []>} : vector<16x16xbf16>, vector<16x8xbf16>, vector<16x8xf32> -> vector<16x8xf32>
    %30 = vector.extract_strided_slice %8 {offsets = [0, 8], sizes = [16, 8], strides = [1, 1]} : vector<16x64xf32> to vector<16x8xf32>
    %31 = arith.truncf %30 : vector<16x8xf32> to vector<16x8xbf16>
    %32 = vector.extract_strided_slice %9 {offsets = [0, 8], sizes = [16, 8], strides = [1, 1]} : vector<16x64xf32> to vector<16x8xf32>
    %33 = arith.truncf %32 : vector<16x8xf32> to vector<16x8xbf16>
    %34 = vector.extract_strided_slice %10 {offsets = [0, 8], sizes = [16, 8], strides = [1, 1]} : vector<16x64xf32> to vector<16x8xf32>
    %35 = arith.truncf %34 : vector<16x8xf32> to vector<16x8xbf16>
    %cst_9 = arith.constant dense<0.000000e+00> : vector<16x16xf32>
    %36 = tpu.matmul %31, %33, %cst_9 {dimension_numbers = #tpu.dot_dimension_numbers<[1], [1], [0], [0], [0, 0, 1, 0], [], []>} : vector<16x8xbf16>, vector<16x8xbf16>, vector<16x16xf32> -> vector<16x16xf32>
    %cst_10 = arith.constant dense<0xFF800000> : vector<16xf32>
    %37 = vector.multi_reduction <maximumf>, %36, %cst_10 [1] : vector<16x16xf32> to vector<16xf32>
    %38 = vector.shape_cast %37 : vector<16xf32> to vector<16x1xf32>
    %39 = vector.broadcast %38 : vector<16x1xf32> to vector<16x16xf32>
    %40 = arith.subf %36, %39 : vector<16x16xf32>
    %41 = math.exp %40 : vector<16x16xf32>
    %cst_11 = arith.constant dense<0.000000e+00> : vector<16xf32>
    %42 = vector.multi_reduction <add>, %41, %cst_11 [1] : vector<16x16xf32> to vector<16xf32>
    %43 = vector.shape_cast %42 : vector<16xf32> to vector<16x1xf32>
    %44 = tpu.reciprocal %43 {approx = true} : vector<16x1xf32> -> vector<16x1xf32>
    %45 = vector.broadcast %44 : vector<16x1xf32> to vector<16x16xf32>
    %46 = arith.mulf %41, %45 : vector<16x16xf32>
    %47 = arith.truncf %46 : vector<16x16xf32> to vector<16x16xbf16>
    %cst_12 = arith.constant dense<0.000000e+00> : vector<16x8xf32>
    %48 = tpu.matmul %47, %35, %cst_12 {dimension_numbers = #tpu.dot_dimension_numbers<[1], [0], [0], [1], [0, 0, 1, 1], [], []>} : vector<16x16xbf16>, vector<16x8xbf16>, vector<16x8xf32> -> vector<16x8xf32>
    %49 = vector.extract_strided_slice %8 {offsets = [0, 16], sizes = [16, 8], strides = [1, 1]} : vector<16x64xf32> to vector<16x8xf32>
    %50 = arith.truncf %49 : vector<16x8xf32> to vector<16x8xbf16>
    %51 = vector.extract_strided_slice %9 {offsets = [0, 16], sizes = [16, 8], strides = [1, 1]} : vector<16x64xf32> to vector<16x8xf32>
    %52 = arith.truncf %51 : vector<16x8xf32> to vector<16x8xbf16>
    %53 = vector.extract_strided_slice %10 {offsets = [0, 16], sizes = [16, 8], strides = [1, 1]} : vector<16x64xf32> to vector<16x8xf32>
    %54 = arith.truncf %53 : vector<16x8xf32> to vector<16x8xbf16>
    %cst_13 = arith.constant dense<0.000000e+00> : vector<16x16xf32>
    %55 = tpu.matmul %50, %52, %cst_13 {dimension_numbers = #tpu.dot_dimension_numbers<[1], [1], [0], [0], [0, 0, 1, 0], [], []>} : vector<16x8xbf16>, vector<16x8xbf16>, vector<16x16xf32> -> vector<16x16xf32>
    %cst_14 = arith.constant dense<0xFF800000> : vector<16xf32>
    %56 = vector.multi_reduction <maximumf>, %55, %cst_14 [1] : vector<16x16xf32> to vector<16xf32>
    %57 = vector.shape_cast %56 : vector<16xf32> to vector<16x1xf32>
    %58 = vector.broadcast %57 : vector<16x1xf32> to vector<16x16xf32>
    %59 = arith.subf %55, %58 : vector<16x16xf32>
    %60 = math.exp %59 : vector<16x16xf32>
    %cst_15 = arith.constant dense<0.000000e+00> : vector<16xf32>
    %61 = vector.multi_reduction <add>, %60, %cst_15 [1] : vector<16x16xf32> to vector<16xf32>
    %62 = vector.shape_cast %61 : vector<16xf32> to vector<16x1xf32>
    %63 = tpu.reciprocal %62 {approx = true} : vector<16x1xf32> -> vector<16x1xf32>
    %64 = vector.broadcast %63 : vector<16x1xf32> to vector<16x16xf32>
    %65 = arith.mulf %60, %64 : vector<16x16xf32>
    %66 = arith.truncf %65 : vector<16x16xf32> to vector<16x16xbf16>
    %cst_16 = arith.constant dense<0.000000e+00> : vector<16x8xf32>
    %67 = tpu.matmul %66, %54, %cst_16 {dimension_numbers = #tpu.dot_dimension_numbers<[1], [0], [0], [1], [0, 0, 1, 1], [], []>} : vector<16x16xbf16>, vector<16x8xbf16>, vector<16x8xf32> -> vector<16x8xf32>
    %68 = vector.extract_strided_slice %8 {offsets = [0, 24], sizes = [16, 8], strides = [1, 1]} : vector<16x64xf32> to vector<16x8xf32>
    %69 = arith.truncf %68 : vector<16x8xf32> to vector<16x8xbf16>
    %70 = vector.extract_strided_slice %9 {offsets = [0, 24], sizes = [16, 8], strides = [1, 1]} : vector<16x64xf32> to vector<16x8xf32>
    %71 = arith.truncf %70 : vector<16x8xf32> to vector<16x8xbf16>
    %72 = vector.extract_strided_slice %10 {offsets = [0, 24], sizes = [16, 8], strides = [1, 1]} : vector<16x64xf32> to vector<16x8xf32>
    %73 = arith.truncf %72 : vector<16x8xf32> to vector<16x8xbf16>
    %cst_17 = arith.constant dense<0.000000e+00> : vector<16x16xf32>
    %74 = tpu.matmul %69, %71, %cst_17 {dimension_numbers = #tpu.dot_dimension_numbers<[1], [1], [0], [0], [0, 0, 1, 0], [], []>} : vector<16x8xbf16>, vector<16x8xbf16>, vector<16x16xf32> -> vector<16x16xf32>
    %cst_18 = arith.constant dense<0xFF800000> : vector<16xf32>
    %75 = vector.multi_reduction <maximumf>, %74, %cst_18 [1] : vector<16x16xf32> to vector<16xf32>
    %76 = vector.shape_cast %75 : vector<16xf32> to vector<16x1xf32>
    %77 = vector.broadcast %76 : vector<16x1xf32> to vector<16x16xf32>
    %78 = arith.subf %74, %77 : vector<16x16xf32>
    %79 = math.exp %78 : vector<16x16xf32>
    %cst_19 = arith.constant dense<0.000000e+00> : vector<16xf32>
    %80 = vector.multi_reduction <add>, %79, %cst_19 [1] : vector<16x16xf32> to vector<16xf32>
    %81 = vector.shape_cast %80 : vector<16xf32> to vector<16x1xf32>
    %82 = tpu.reciprocal %81 {approx = true} : vector<16x1xf32> -> vector<16x1xf32>
    %83 = vector.broadcast %82 : vector<16x1xf32> to vector<16x16xf32>
    %84 = arith.mulf %79, %83 : vector<16x16xf32>
    %85 = arith.truncf %84 : vector<16x16xf32> to vector<16x16xbf16>
    %cst_20 = arith.constant dense<0.000000e+00> : vector<16x8xf32>
    %86 = tpu.matmul %85, %73, %cst_20 {dimension_numbers = #tpu.dot_dimension_numbers<[1], [0], [0], [1], [0, 0, 1, 1], [], []>} : vector<16x16xbf16>, vector<16x8xbf16>, vector<16x8xf32> -> vector<16x8xf32>
    %87 = vector.extract_strided_slice %8 {offsets = [0, 32], sizes = [16, 8], strides = [1, 1]} : vector<16x64xf32> to vector<16x8xf32>
    %88 = arith.truncf %87 : vector<16x8xf32> to vector<16x8xbf16>
    %89 = vector.extract_strided_slice %9 {offsets = [0, 32], sizes = [16, 8], strides = [1, 1]} : vector<16x64xf32> to vector<16x8xf32>
    %90 = arith.truncf %89 : vector<16x8xf32> to vector<16x8xbf16>
    %91 = vector.extract_strided_slice %10 {offsets = [0, 32], sizes = [16, 8], strides = [1, 1]} : vector<16x64xf32> to vector<16x8xf32>
    %92 = arith.truncf %91 : vector<16x8xf32> to vector<16x8xbf16>
    %cst_21 = arith.constant dense<0.000000e+00> : vector<16x16xf32>
    %93 = tpu.matmul %88, %90, %cst_21 {dimension_numbers = #tpu.dot_dimension_numbers<[1], [1], [0], [0], [0, 0, 1, 0], [], []>} : vector<16x8xbf16>, vector<16x8xbf16>, vector<16x16xf32> -> vector<16x16xf32>
    %cst_22 = arith.constant dense<0xFF800000> : vector<16xf32>
    %94 = vector.multi_reduction <maximumf>, %93, %cst_22 [1] : vector<16x16xf32> to vector<16xf32>
    %95 = vector.shape_cast %94 : vector<16xf32> to vector<16x1xf32>
    %96 = vector.broadcast %95 : vector<16x1xf32> to vector<16x16xf32>
    %97 = arith.subf %93, %96 : vector<16x16xf32>
    %98 = math.exp %97 : vector<16x16xf32>
    %cst_23 = arith.constant dense<0.000000e+00> : vector<16xf32>
    %99 = vector.multi_reduction <add>, %98, %cst_23 [1] : vector<16x16xf32> to vector<16xf32>
    %100 = vector.shape_cast %99 : vector<16xf32> to vector<16x1xf32>
    %101 = tpu.reciprocal %100 {approx = true} : vector<16x1xf32> -> vector<16x1xf32>
    %102 = vector.broadcast %101 : vector<16x1xf32> to vector<16x16xf32>
    %103 = arith.mulf %98, %102 : vector<16x16xf32>
    %104 = arith.truncf %103 : vector<16x16xf32> to vector<16x16xbf16>
    %cst_24 = arith.constant dense<0.000000e+00> : vector<16x8xf32>
    %105 = tpu.matmul %104, %92, %cst_24 {dimension_numbers = #tpu.dot_dimension_numbers<[1], [0], [0], [1], [0, 0, 1, 1], [], []>} : vector<16x16xbf16>, vector<16x8xbf16>, vector<16x8xf32> -> vector<16x8xf32>
    %106 = vector.extract_strided_slice %8 {offsets = [0, 40], sizes = [16, 8], strides = [1, 1]} : vector<16x64xf32> to vector<16x8xf32>
    %107 = arith.truncf %106 : vector<16x8xf32> to vector<16x8xbf16>
    %108 = vector.extract_strided_slice %9 {offsets = [0, 40], sizes = [16, 8], strides = [1, 1]} : vector<16x64xf32> to vector<16x8xf32>
    %109 = arith.truncf %108 : vector<16x8xf32> to vector<16x8xbf16>
    %110 = vector.extract_strided_slice %10 {offsets = [0, 40], sizes = [16, 8], strides = [1, 1]} : vector<16x64xf32> to vector<16x8xf32>
    %111 = arith.truncf %110 : vector<16x8xf32> to vector<16x8xbf16>
    %cst_25 = arith.constant dense<0.000000e+00> : vector<16x16xf32>
    %112 = tpu.matmul %107, %109, %cst_25 {dimension_numbers = #tpu.dot_dimension_numbers<[1], [1], [0], [0], [0, 0, 1, 0], [], []>} : vector<16x8xbf16>, vector<16x8xbf16>, vector<16x16xf32> -> vector<16x16xf32>
    %cst_26 = arith.constant dense<0xFF800000> : vector<16xf32>
    %113 = vector.multi_reduction <maximumf>, %112, %cst_26 [1] : vector<16x16xf32> to vector<16xf32>
    %114 = vector.shape_cast %113 : vector<16xf32> to vector<16x1xf32>
    %115 = vector.broadcast %114 : vector<16x1xf32> to vector<16x16xf32>
    %116 = arith.subf %112, %115 : vector<16x16xf32>
    %117 = math.exp %116 : vector<16x16xf32>
    %cst_27 = arith.constant dense<0.000000e+00> : vector<16xf32>
    %118 = vector.multi_reduction <add>, %117, %cst_27 [1] : vector<16x16xf32> to vector<16xf32>
    %119 = vector.shape_cast %118 : vector<16xf32> to vector<16x1xf32>
    %120 = tpu.reciprocal %119 {approx = true} : vector<16x1xf32> -> vector<16x1xf32>
    %121 = vector.broadcast %120 : vector<16x1xf32> to vector<16x16xf32>
    %122 = arith.mulf %117, %121 : vector<16x16xf32>
    %123 = arith.truncf %122 : vector<16x16xf32> to vector<16x16xbf16>
    %cst_28 = arith.constant dense<0.000000e+00> : vector<16x8xf32>
    %124 = tpu.matmul %123, %111, %cst_28 {dimension_numbers = #tpu.dot_dimension_numbers<[1], [0], [0], [1], [0, 0, 1, 1], [], []>} : vector<16x16xbf16>, vector<16x8xbf16>, vector<16x8xf32> -> vector<16x8xf32>
    %125 = vector.extract_strided_slice %8 {offsets = [0, 48], sizes = [16, 8], strides = [1, 1]} : vector<16x64xf32> to vector<16x8xf32>
    %126 = arith.truncf %125 : vector<16x8xf32> to vector<16x8xbf16>
    %127 = vector.extract_strided_slice %9 {offsets = [0, 48], sizes = [16, 8], strides = [1, 1]} : vector<16x64xf32> to vector<16x8xf32>
    %128 = arith.truncf %127 : vector<16x8xf32> to vector<16x8xbf16>
    %129 = vector.extract_strided_slice %10 {offsets = [0, 48], sizes = [16, 8], strides = [1, 1]} : vector<16x64xf32> to vector<16x8xf32>
    %130 = arith.truncf %129 : vector<16x8xf32> to vector<16x8xbf16>
    %cst_29 = arith.constant dense<0.000000e+00> : vector<16x16xf32>
    %131 = tpu.matmul %126, %128, %cst_29 {dimension_numbers = #tpu.dot_dimension_numbers<[1], [1], [0], [0], [0, 0, 1, 0], [], []>} : vector<16x8xbf16>, vector<16x8xbf16>, vector<16x16xf32> -> vector<16x16xf32>
    %cst_30 = arith.constant dense<0xFF800000> : vector<16xf32>
    %132 = vector.multi_reduction <maximumf>, %131, %cst_30 [1] : vector<16x16xf32> to vector<16xf32>
    %133 = vector.shape_cast %132 : vector<16xf32> to vector<16x1xf32>
    %134 = vector.broadcast %133 : vector<16x1xf32> to vector<16x16xf32>
    %135 = arith.subf %131, %134 : vector<16x16xf32>
    %136 = math.exp %135 : vector<16x16xf32>
    %cst_31 = arith.constant dense<0.000000e+00> : vector<16xf32>
    %137 = vector.multi_reduction <add>, %136, %cst_31 [1] : vector<16x16xf32> to vector<16xf32>
    %138 = vector.shape_cast %137 : vector<16xf32> to vector<16x1xf32>
    %139 = tpu.reciprocal %138 {approx = true} : vector<16x1xf32> -> vector<16x1xf32>
    %140 = vector.broadcast %139 : vector<16x1xf32> to vector<16x16xf32>
    %141 = arith.mulf %136, %140 : vector<16x16xf32>
    %142 = arith.truncf %141 : vector<16x16xf32> to vector<16x16xbf16>
    %cst_32 = arith.constant dense<0.000000e+00> : vector<16x8xf32>
    %143 = tpu.matmul %142, %130, %cst_32 {dimension_numbers = #tpu.dot_dimension_numbers<[1], [0], [0], [1], [0, 0, 1, 1], [], []>} : vector<16x16xbf16>, vector<16x8xbf16>, vector<16x8xf32> -> vector<16x8xf32>
    %144 = vector.extract_strided_slice %8 {offsets = [0, 56], sizes = [16, 8], strides = [1, 1]} : vector<16x64xf32> to vector<16x8xf32>
    %145 = arith.truncf %144 : vector<16x8xf32> to vector<16x8xbf16>
    %146 = vector.extract_strided_slice %9 {offsets = [0, 56], sizes = [16, 8], strides = [1, 1]} : vector<16x64xf32> to vector<16x8xf32>
    %147 = arith.truncf %146 : vector<16x8xf32> to vector<16x8xbf16>
    %148 = vector.extract_strided_slice %10 {offsets = [0, 56], sizes = [16, 8], strides = [1, 1]} : vector<16x64xf32> to vector<16x8xf32>
    %149 = arith.truncf %148 : vector<16x8xf32> to vector<16x8xbf16>
    %cst_33 = arith.constant dense<0.000000e+00> : vector<16x16xf32>
    %150 = tpu.matmul %145, %147, %cst_33 {dimension_numbers = #tpu.dot_dimension_numbers<[1], [1], [0], [0], [0, 0, 1, 0], [], []>} : vector<16x8xbf16>, vector<16x8xbf16>, vector<16x16xf32> -> vector<16x16xf32>
    %cst_34 = arith.constant dense<0xFF800000> : vector<16xf32>
    %151 = vector.multi_reduction <maximumf>, %150, %cst_34 [1] : vector<16x16xf32> to vector<16xf32>
    %152 = vector.shape_cast %151 : vector<16xf32> to vector<16x1xf32>
    %153 = vector.broadcast %152 : vector<16x1xf32> to vector<16x16xf32>
    %154 = arith.subf %150, %153 : vector<16x16xf32>
    %155 = math.exp %154 : vector<16x16xf32>
    %cst_35 = arith.constant dense<0.000000e+00> : vector<16xf32>
    %156 = vector.multi_reduction <add>, %155, %cst_35 [1] : vector<16x16xf32> to vector<16xf32>
    %157 = vector.shape_cast %156 : vector<16xf32> to vector<16x1xf32>
    %158 = tpu.reciprocal %157 {approx = true} : vector<16x1xf32> -> vector<16x1xf32>
    %159 = vector.broadcast %158 : vector<16x1xf32> to vector<16x16xf32>
    %160 = arith.mulf %155, %159 : vector<16x16xf32>
    %161 = arith.truncf %160 : vector<16x16xf32> to vector<16x16xbf16>
    %cst_36 = arith.constant dense<0.000000e+00> : vector<16x8xf32>
    %162 = tpu.matmul %161, %149, %cst_36 {dimension_numbers = #tpu.dot_dimension_numbers<[1], [0], [0], [1], [0, 0, 1, 1], [], []>} : vector<16x16xbf16>, vector<16x8xbf16>, vector<16x8xf32> -> vector<16x8xf32>
    %163 = tpu.concatenate %29, %48, %67, %86, %105, %124, %143, %162 in 1 : vector<16x8xf32>, vector<16x8xf32>, vector<16x8xf32>, vector<16x8xf32>, vector<16x8xf32>, vector<16x8xf32>, vector<16x8xf32>, vector<16x8xf32> -> vector<16x64xf32>
    %164 = arith.truncf %163 : vector<16x64xf32> to vector<16x64xbf16>
    %c0_37 = arith.constant 0 : index
    %c0_38 = arith.constant 0 : index
    %165 = vector.load %arg3[%c0_37, %c0_38] : memref<64x64xf32, #tpu.memory_space<vmem>>, vector<64x64xf32>
    %166 = arith.truncf %165 : vector<64x64xf32> to vector<64x64xbf16>
    %cst_39 = arith.constant dense<0.000000e+00> : vector<16x64xf32>
    %167 = tpu.matmul %164, %166, %cst_39 {dimension_numbers = #tpu.dot_dimension_numbers<[1], [0], [0], [1], [0, 0, 1, 1], [], []>} : vector<16x64xbf16>, vector<64x64xbf16>, vector<16x64xf32> -> vector<16x64xf32>
    %c0_40 = arith.constant 0 : index
    %c0_41 = arith.constant 0 : index
    %168 = vector.load %arg4[%c0_40, %c0_41] : memref<1x64xf32, #tpu.memory_space<vmem>>, vector<1x64xf32>
    %169 = vector.broadcast %168 : vector<1x64xf32> to vector<16x64xf32>
    %170 = arith.addf %167, %169 : vector<16x64xf32>
    %c0_42 = arith.constant 0 : index
    %c0_43 = arith.constant 0 : index
    %c0_44 = arith.constant 0 : index
    %171 = vector.load %arg5[%c0_42, %c0_43, %c0_44] : memref<1x16x64xf32, #tpu.memory_space<vmem>>, vector<1x16x64xf32>
    %172 = vector.shape_cast %171 : vector<1x16x64xf32> to vector<16x64xf32>
    %173 = vector.shape_cast %170 : vector<16x64xf32> to vector<1x16x64xf32>
    tpu.vector_store %arg5[%c0_42, %c0_43, %c0_44], %173 {strides = array<i32>} : memref<1x16x64xf32, #tpu.memory_space<vmem>>, vector<1x16x64xf32>,
    return
  }
  func.func @transform_0(%arg0: i32) -> (i32, i32, i32) {
    %c0_i32 = arith.constant 0 : i32
    %c0_i32_0 = arith.constant 0 : i32
    %c0_i32_1 = arith.constant 0 : i32
    return %arg0, %c0_i32, %c0_i32_0 : i32, i32, i32
  }
  func.func @transform_1(%arg0: i32) -> (i32, i32) {
    %c0_i32 = arith.constant 0 : i32
    %c0_i32_0 = arith.constant 0 : i32
    %c0_i32_1 = arith.constant 0 : i32
    return %c0_i32, %c0_i32_0 : i32, i32
  }
  func.func @transform_2(%arg0: i32) -> (i32, i32) {
    %c0_i32 = arith.constant 0 : i32
    %c0_i32_0 = arith.constant 0 : i32
    %c0_i32_1 = arith.constant 0 : i32
    return %c0_i32, %c0_i32_0 : i32, i32
  }
  func.func @transform_3(%arg0: i32) -> (i32, i32) {
    %c0_i32 = arith.constant 0 : i32
    %c0_i32_0 = arith.constant 0 : i32
    %c0_i32_1 = arith.constant 0 : i32
    return %c0_i32, %c0_i32_0 : i32, i32
  }
  func.func @transform_4(%arg0: i32) -> (i32, i32, i32) {
    %c0_i32 = arith.constant 0 : i32
    %c0_i32_0 = arith.constant 0 : i32
    %c0_i32_1 = arith.constant 0 : i32
    return %arg0, %c0_i32, %c0_i32_0 : i32, i32, i32
  }
}

</mosaic_0001>

<llo_original>
// kernel: attention_forward.1
$region0: #{attention_forward.1}
  #allocation0 [shape = 'u32[]', space=smem, size = 0x4, offset = 0x4, fixed_abs, tag = 'smem constant byte address 0x4 - core index']
  #allocation1 [shape = 'u32[144,128]{1,0:T(1,128)}', space=vmem, size = 0x12000, scoped, tag = 'internal scratch']
  %s0 = inlined_call_operand.hbm [shape: f32[2,16,64], index: 0, kind: input, shape index: {}]
  %s1 = inlined_call_operand.hbm [shape: f32[64,192], index: 1, kind: input, shape index: {}]
  %s2 = inlined_call_operand.hbm [shape: f32[64,64], index: 2, kind: input, shape index: {}]
  %s3 = inlined_call_operand.vmem [shape: f32[1,64], index: 3, kind: input, shape index: {}]
  %s4 = inlined_call_operand.hbm [shape: f32[2,16,64], index: 4, kind: output, shape index: {}]
  %s5 = sld [smem:[#allocation0]]
  $region61: #{attention_forward.1} parent=0
    _
  %s7 = ssub.s32 1, %s5
  %s8 = scalar_select 0, %s7, %s5
  $region1: #{attention_forward.1} parent=0
    #allocation2 [shape = 'u8[16384]{0}', space=vmem, size = 0x4000, scoped, tag = 'input window, operand 0']
    #allocation3 [shape = 's32[2]{0}', space=sflag, size = 0x8, scoped, tag = 'scoped memory for attention_forward.1']
    #allocation4 [shape = 's32[2]{0}', space=sflag, size = 0x8, scoped, tag = 'scoped memory for attention_forward.1']
    #allocation5 [shape = 'u8[65536]{0}', space=vmem, size = 0x10000, scoped, tag = 'input window, operand 1, single buffered']
    #allocation6 [shape = 's32[1]{0}', space=sflag, size = 0x4, scoped, tag = 'scoped memory for attention_forward.1']
    #allocation7 [shape = 'u8[32768]{0}', space=vmem, size = 0x8000, scoped, tag = 'input window, operand 2, single buffered']
    #allocation8 [shape = 'u8[16384]{0}', space=vmem, size = 0x4000, scoped, tag = 'output window, operand 0']
    %9 = vsyncpa [#allocation3], 0
    %s10 = scalar_lea.sflag [#allocation3], 1
    %11 = vsyncpa %s10, 0
    %12 = vsyncpa [#allocation6], 0
    %13 = vsyncpa [#allocation4], 0
    %s14 = scalar_lea.sflag [#allocation4], 1
    %15 = vsyncpa %s14, 0
    loop: start=0, step=1, limit=4
    $region2: #{attention_forward.1} parent=1 // loop_pre_header
      _
    $region3: #{attention_forward.1} parent=1 // loop_header
      %s17 = sphi 0, %s21
      %p18 = scmp.ge.s32.totalorder %s17, 4
      %s27 = sphi 0, %s29
      %s30 = sphi 0, %s27
      %s31 = sphi 0, %s30
      %s47 = sphi 0, %s31
      %s51 = sphi 0, %s51
      %s53 = sphi 0, %s51
      %s54 = sphi 0, %s53
      %s68 = sphi 0, %s54
      %s72 = sphi 0, %s72
      %s74 = sphi 0, %s72
      %s75 = sphi 0, %s74
      %s89 = sphi 0, %s75
      %s93 = sphi 0, %s93
      %s95 = sphi 0, %s93
      %s96 = sphi 0, %s95
      %s110 = sphi 0, %s96
      %s116 = sphi 0, %s118
      %s119 = sphi 0, %s116
      %s120 = sphi 0, %s119
      %s136 = sphi 0, %s120
    $region4: #{attention_forward.1} parent=1 // loop_header_branch
      %20 = sbr.rel (%p18) target = $region8
    $region5: #{attention_forward.1} parent=1 // loop_body
      %s22 = ssub.s32 %s17, 1
      %s23 = ssub.s32 %s17, 2
      %s24 = sadd.s32 %s17, 1
      %s25 = ssub.s32 %s17, %s24
      %p26 = scmp.eq.s32.totalorder %s25, 0
      %s28 = sadd.s32 %s27, 1
      %s29 = scalar_select %p26, %s27, %s28
      %p32 = pneg %p26
      %p33 = scmp.eq.s32.totalorder %s17, 1
      %p34 = por %p32, %p33
      %p35 = scmp.ne.s32.totalorder %s27, %s30
      %p36 = scmp.eq.s32.totalorder %s17, 0
      %p37 = por %p35, %p36
      %p38 = scmp.ne.s32.totalorder %s27, %s30
      %p39 = scmp.eq.s32.totalorder %s22, 1
      %p40 = por %p38, %p39
      %p41 = scmp.ne.s32.totalorder %s30, %s31
      %p42 = scmp.eq.s32.totalorder %s22, 0
      %p43 = por %p41, %p42
      %p44 = scmp.ne.s32.totalorder %s30, %s31
      %p45 = scmp.eq.s32.totalorder %s23, 1
      %p46 = por %p44, %p45
      %p48 = scmp.ne.s32.totalorder %s31, %s47
      %p49 = scmp.eq.s32.totalorder %s23, 0
      %p50 = por %p48, %p49
      %s52 = sadd.s32 %s51, 1
      %p55 = scmp.eq.s32.totalorder %s17, 1
      %p56 = scmp.ne.s32.totalorder %s51, %s53
      %p57 = scmp.eq.s32.totalorder %s17, 0
      %p58 = por %p56, %p57
      %p59 = scmp.ne.s32.totalorder %s51, %s53
      %p60 = scmp.eq.s32.totalorder %s22, 1
      %p61 = por %p59, %p60
      %p62 = scmp.ne.s32.totalorder %s53, %s54
      %p63 = scmp.eq.s32.totalorder %s22, 0
      %p64 = por %p62, %p63
      %p65 = scmp.ne.s32.totalorder %s53, %s54
      %p66 = scmp.eq.s32.totalorder %s23, 1
      %p67 = por %p65, %p66
      %p69 = scmp.ne.s32.totalorder %s54, %s68
      %p70 = scmp.eq.s32.totalorder %s23, 0
      %p71 = por %p69, %p70
      %s73 = sadd.s32 %s72, 1
      %p76 = scmp.eq.s32.totalorder %s17, 1
      %p77 = scmp.ne.s32.totalorder %s72, %s74
      %p78 = scmp.eq.s32.totalorder %s17, 0
      %p79 = por %p77, %p78
      %p80 = scmp.ne.s32.totalorder %s72, %s74
      %p81 = scmp.eq.s32.totalorder %s22, 1
      %p82 = por %p80, %p81
      %p83 = scmp.ne.s32.totalorder %s74, %s75
      %p84 = scmp.eq.s32.totalorder %s22, 0
      %p85 = por %p83, %p84
      %p86 = scmp.ne.s32.totalorder %s74, %s75
      %p87 = scmp.eq.s32.totalorder %s23, 1
      %p88 = por %p86, %p87
      %p90 = scmp.ne.s32.totalorder %s75, %s89
      %p91 = scmp.eq.s32.totalorder %s23, 0
      %p92 = por %p90, %p91
      %s94 = sadd.s32 %s93, 1
      %p97 = scmp.eq.s32.totalorder %s17, 1
      %p98 = scmp.ne.s32.totalorder %s93, %s95
      %p99 = scmp.eq.s32.totalorder %s17, 0
      %p100 = por %p98, %p99
      %p101 = scmp.ne.s32.totalorder %s93, %s95
      %p102 = scmp.eq.s32.totalorder %s22, 1
      %p103 = por %p101, %p102
      %p104 = scmp.ne.s32.totalorder %s95, %s96
      %p105 = scmp.eq.s32.totalorder %s22, 0
      %p106 = por %p104, %p105
      %p107 = scmp.ne.s32.totalorder %s95, %s96
      %p108 = scmp.eq.s32.totalorder %s23, 1
      %p109 = por %p107, %p108
      %p111 = scmp.ne.s32.totalorder %s96, %s110
      %p112 = scmp.eq.s32.totalorder %s23, 0
      %p113 = por %p111, %p112
      %s114 = ssub.s32 %s17, %s24
      %p115 = scmp.eq.s32.totalorder %s114, 0
      %s117 = sadd.s32 %s116, 1
      %s118 = scalar_select %p115, %s116, %s117
      %p121 = pneg %p115
      %p122 = scmp.eq.s32.totalorder %s17, 1
      %p123 = por %p121, %p122
      %p124 = scmp.ne.s32.totalorder %s116, %s119
      %p125 = scmp.eq.s32.totalorder %s17, 0
      %p126 = por %p124, %p125
      %p127 = scmp.ne.s32.totalorder %s116, %s119
      %p128 = scmp.eq.s32.totalorder %s22, 1
      %p129 = por %p127, %p128
      %p130 = scmp.ne.s32.totalorder %s119, %s120
      %p131 = scmp.eq.s32.totalorder %s22, 0
      %p132 = por %p130, %p131
      %p133 = scmp.ne.s32.totalorder %s119, %s120
      %p134 = scmp.eq.s32.totalorder %s23, 1
      %p135 = por %p133, %p134
      %p137 = scmp.ne.s32.totalorder %s120, %s136
      %p138 = scmp.eq.s32.totalorder %s23, 0
      %p139 = por %p137, %p138
      %p140 = scmp.le.s32.totalorder 1, %s17
      %p141 = scmp.lt.s32.totalorder %s17, 3
      %p142 = pnand %p140, %p141
      %p143 = pneg %p142
      // Predicated region
      $region9: #{attention_forward.1} parent=5 // pred_check
        _
      $region10: #{attention_forward.1} parent=5 // pred_check_branch
        %145 = sbr.rel (%p142) target = $region12
      $region11: #{attention_forward.1} parent=5 // pred_region
        %s146 = ssub.s32 %s17, 1
        // Predicated region
        $region13: #{attention_forward.1} parent=11 // pred_check
          %p147 = pneg %p64
        $region14: #{attention_forward.1} parent=11 // pred_check_branch
          %149 = sbr.rel (%p147) target = $region16
        $region15: #{attention_forward.1} parent=11 // pred_region
          %s151 = ssub.s32 2048, 2048
          %152 = vsyncadd [#allocation6], %s151
          %s153 = sshll.u32 [#allocation5], 4
          %s154 = int_to_ptr.vmem [resolvable:$true] %s153
          %159 = dma.hbm_to_vmem [thread:$0]  %s1, 2048, %s154, [#allocation6], 256, 256, 16
        $region16: #{attention_forward.1} parent=11 // pred_fallthru
          _
        // Predicated region
        $region17: #{attention_forward.1} parent=11 // pred_check
          %p160 = pneg %p85
        $region18: #{attention_forward.1} parent=11 // pred_check_branch
          %162 = sbr.rel (%p160) target = $region20
        $region19: #{attention_forward.1} parent=11 // pred_region
          %s164 = ssub.s32 1024, 1024
          %165 = vsyncadd [#allocation6], %s164
          %s166 = sshll.u32 [#allocation7], 4
          %s167 = int_to_ptr.vmem [resolvable:$true] %s166
          %172 = dma.hbm_to_vmem [thread:$0]  %s2, 1024, %s167, [#allocation6], 128, 128, 8
        $region20: #{attention_forward.1} parent=11 // pred_fallthru
          _
        // Predicated region
        $region21: #{attention_forward.1} parent=11 // pred_check
          %p173 = pneg %p106
        $region22: #{attention_forward.1} parent=11 // pred_check_branch
          %175 = sbr.rel (%p173) target = $region24
        $region23: #{attention_forward.1} parent=11 // pred_region
          _
        $region24: #{attention_forward.1} parent=11 // pred_fallthru
          _
      $region12: #{attention_forward.1} parent=5 // pred_fallthru
        _
      %p176 = scmp.lt.s32.totalorder %s17, 2
      // Predicated region
      $region25: #{attention_forward.1} parent=5 // pred_check
        %p177 = pneg %p176
      $region26: #{attention_forward.1} parent=5 // pred_check_branch
        %179 = sbr.rel (%p177) target = $region28
      $region27: #{attention_forward.1} parent=5 // pred_region
        // Predicated region
        $region29: #{attention_forward.1} parent=27 // pred_check
          %p180 = pneg %p37
        $region30: #{attention_forward.1} parent=27 // pred_check_branch
          %182 = sbr.rel (%p180) target = $region32
        $region31: #{attention_forward.1} parent=27 // pred_region
          %s183 = sand.u32 %s27, 1
          %s184 = scalar_lea.sflag [#allocation3], %s183
          %s185 = sand.u32 %s27, 1
          %s186 = smul.addr %s185, 16
          %s187 = scalar_lea.vmem [#allocation2], %s186
          %s189 = ssub.s32 256, 256
          %190 = vsyncadd %s184, %s189
          %s191 = smul.addr %s17, 2
          %s192 = smul.addr %s191, 128
          %s193 = scalar_lea.hbm %s0, %s192
          %s194 = sshll.u32 %s187, 4
          %s195 = int_to_ptr.vmem [resolvable:$true] %s194
          %200 = dma.hbm_to_vmem [thread:$0]  %s193, 256, %s195, %s184, 128, 128, 8
        $region32: #{attention_forward.1} parent=27 // pred_fallthru
          _
      $region28: #{attention_forward.1} parent=5 // pred_fallthru
        _
      %p201 = scmp.le.s32.totalorder 1, %s17
      %p202 = scmp.lt.s32.totalorder %s17, 3
      %p203 = pnand %p201, %p202
      %p204 = pneg %p203
      // Predicated region
      $region33: #{attention_forward.1} parent=5 // pred_check
        _
      $region34: #{attention_forward.1} parent=5 // pred_check_branch
        %206 = sbr.rel (%p203) target = $region36
      $region35: #{attention_forward.1} parent=5 // pred_region
        %s207 = ssub.s32 %s17, 1
        %s208 = sand.u32 %s30, 1
        %s209 = scalar_lea.sflag [#allocation3], %s208
        %s210 = sand.u32 %s30, 1
        %s211 = smul.addr %s210, 16
        %s212 = scalar_lea.vmem [#allocation2], %s211
        // Predicated region
        $region37: #{attention_forward.1} parent=35 // pred_check
          %p213 = pneg %p43
        $region38: #{attention_forward.1} parent=35 // pred_check_branch
          %215 = sbr.rel (%p213) target = $region40
        $region39: #{attention_forward.1} parent=35 // pred_region
          %216 = dma.done %s209, 256
        $region40: #{attention_forward.1} parent=35 // pred_fallthru
          _
        // Predicated region
        $region41: #{attention_forward.1} parent=35 // pred_check
          %p217 = pneg %p64
        $region42: #{attention_forward.1} parent=35 // pred_check_branch
          %219 = sbr.rel (%p217) target = $region44
        $region43: #{attention_forward.1} parent=35 // pred_region
          %220 = dma.done [#allocation6], 2048
        $region44: #{attention_forward.1} parent=35 // pred_fallthru
          _
        // Predicated region
        $region45: #{attention_forward.1} parent=35 // pred_check
          %p221 = pneg %p85
        $region46: #{attention_forward.1} parent=35 // pred_check_branch
          %223 = sbr.rel (%p221) target = $region48
        $region47: #{attention_forward.1} parent=35 // pred_region
          %224 = dma.done [#allocation6], 1024
        $region48: #{attention_forward.1} parent=35 // pred_fallthru
          _
        %s225 = sand.u32 %s30, 1
        %s226 = scalar_lea.sflag [#allocation3], %s225
        %s227 = sand.u32 %s30, 1
        %s228 = smul.addr %s227, 16
        %s229 = scalar_lea.vmem [#allocation2], %s228
        %p230 = pneg %p43
        %p231 = pneg %p40
        %p232 = pneg %p64
        %p233 = pneg %p61
        %p234 = pneg %p85
        %p235 = pneg %p82
        %p236 = pneg %p106
        %p237 = pneg %p103
        %p238 = pneg %p132
        %p239 = pneg %p129
        %s240 = sand.u32 %s119, 1
        %s241 = scalar_lea.sflag [#allocation4], %s240
        %s242 = sand.u32 %s119, 1
        %s243 = smul.addr %s242, 16
        %s244 = scalar_lea.vmem [#allocation8], %s243
        %v246 = vld [vmem:[%s212] sm:$0xff]
        %v247 = vld [vmem:[%s212 + $0x8] sm:$0xff]
        %v248 = vpack.c.bf16 %v247, %v246
        %v249 = vld [vmem:[#allocation5] sm:$0xff]
        %v250 = vld [vmem:[#allocation5 + $0x8] sm:$0xff]
        %v251 = vld [vmem:[#allocation5 + $0x10] sm:$0xff]
        %v252 = vld [vmem:[#allocation5 + $0x18] sm:$0xff]
        %v253 = vld [vmem:[#allocation5 + $0x20] sm:$0xff]
        %v254 = vld [vmem:[#allocation5 + $0x28] sm:$0xff]
        %v255 = vld [vmem:[#allocation5 + $0x30] sm:$0xff]
        %v256 = vld [vmem:[#allocation5 + $0x38] sm:$0xff]
        %v257 = vld [vmem:[#allocation5 + $0x40] sm:$0xff]
        %v258 = vld [vmem:[#allocation5 + $0x48] sm:$0xff]
        %v259 = vld [vmem:[#allocation5 + $0x50] sm:$0xff]
        %v260 = vld [vmem:[#allocation5 + $0x58] sm:$0xff]
        %v261 = vld [vmem:[#allocation5 + $0x60] sm:$0xff]
        %v262 = vld [vmem:[#allocation5 + $0x68] sm:$0xff]
        %v263 = vld [vmem:[#allocation5 + $0x70] sm:$0xff]
        %v264 = vld [vmem:[#allocation5 + $0x78] sm:$0xff]
        %v265 = vpack.c.bf16 %v251, %v249
        %v266 = vpack.c.bf16 %v252, %v250
        %v267 = vpack.c.bf16 %v255, %v253
        %v268 = vpack.c.bf16 %v256, %v254
        %v269 = vpack.c.bf16 %v259, %v257
        %v270 = vpack.c.bf16 %v260, %v258
        %v271 = vpack.c.bf16 %v263, %v261
        %v272 = vpack.c.bf16 %v264, %v262
        %vm273 = vcmask 523264
        %v275 = vsel %vm273, %v248, 0
        %277 = vmatprep.subr.bf16.mxu0 %v266
        %278 = vmatpush1.bf16.msra.mxu0 %v265
        %279 = vmatprep.subr.bf16.mxu0 %v268
        %280 = vmatpush1.bf16.msra.mxu0 %v267
        %281 = vmatprep.subr.bf16.mxu0 %v270
        %282 = vmatpush1.bf16.msra.mxu0 %v269
        %283 = vmatprep.subr.bf16.mxu0 %v272
        %284 = vmatpush1.bf16.msra.mxu0 %v271
        %285 = vmatprep.subr.bf16.mxu0 0
        %286 = vmatpush1.bf16.msra.mxu0 0
        %287 = vmatprep.subr.bf16.mxu0 0
        %288 = vmatpush1.bf16.msra.mxu0 0
        %289 = vmatprep.subr.bf16.mxu0 0
        %290 = vmatpush1.bf16.msra.mxu0 0
        %291 = vmatprep.subr.bf16.mxu0 0
        %292 = vmatpush1.bf16.msra.mxu0 0
        %293 = vmatprep.subr.bf16.mxu0 0
        %294 = vmatpush1.bf16.msra.mxu0 0
        %295 = vmatprep.subr.bf16.mxu0 0
        %296 = vmatpush1.bf16.msra.mxu0 0
        %297 = vmatprep.subr.bf16.mxu0 0
        %298 = vmatpush1.bf16.msra.mxu0 0
        %299 = vmatprep.subr.bf16.mxu0 0
        %300 = vmatpush1.bf16.msra.mxu0 0
        %301 = vmatprep.subr.bf16.mxu0 0
        %302 = vmatpush1.bf16.msra.mxu0 0
        %303 = vmatprep.subr.bf16.mxu0 0
        %304 = vmatpush1.bf16.msra.mxu0 0
        %305 = vmatprep.subr.bf16.mxu0 0
        %306 = vmatpush1.bf16.msra.mxu0 0
        %307 = vmatprep.subr.bf16.mxu0 0
        %308 = vmatpush1.bf16.msra.mxu0 0
        %309 = vmatprep.mubr.bf16.mxu0 0
        %310 = vmatmul.mubr.bf16.gmra.mrb[0].mxu0 %v275
        %v311 = vpop.f32.mrb[0].mxu0
        %v312 = vadd.f32 0.0, %v311
        %v313 = vpop.f32.mrb[0].mxu0
        %v314 = vadd.f32 0.0, %v313
        %v315 = vpop.f32.mrb[0].mxu0
        %v316 = vadd.f32 0.0, %v315
        %v317 = vpop.f32.mrb[0].mxu0
        %v318 = vadd.f32 0.0, %v317
        %319 = vdwg.mxu0
        %v320 = vmul.f32 %v312, 0.35355338
        %v321 = vmul.f32 %v316, 0.35355338
        %v322 = vpack.c.bf16 %v321, %v320
        %v323 = vpack.c.bf16 %v316, %v312
        %v324 = vpack.c.bf16 %v318, %v314
        %326 = vrot.lane.b32.xlu0 %v323, 64
        %v327 = vpop.permute.xlu0 %326
        %vm328 = vcmask 64512
        %v330 = vsel %vm328, %v322, 0
        %v333 = vsel %vm328, %v327, 0
        %335 = vmatprep.subr.bf16.mxu0 0
        %336 = vmatpush1.bf16.xpose.msra.mxu0 %v333
        %337 = vmatprep.subr.bf16.mxu0 0
        %338 = vmatpush1.bf16.xpose.msra.mxu0 0
        %339 = vmatprep.subr.bf16.mxu0 0
        %340 = vmatpush1.bf16.xpose.msra.mxu0 0
        %341 = vmatprep.subr.bf16.mxu0 0
        %342 = vmatpush1.bf16.xpose.msra.mxu0 0
        %343 = vmatprep.subr.bf16.mxu0 0
        %344 = vmatpush1.bf16.xpose.msra.mxu0 0
        %345 = vmatprep.subr.bf16.mxu0 0
        %346 = vmatpush1.bf16.xpose.msra.mxu0 0
        %347 = vmatprep.subr.bf16.mxu0 0
        %348 = vmatpush1.bf16.xpose.msra.mxu0 0
        %349 = vmatprep.subr.bf16.mxu0 0
        %350 = vmatpush1.bf16.xpose.msra.mxu0 0
        %351 = vmatprep.subr.bf16.mxu0 0
        %352 = vmatpush1.bf16.xpose.msra.mxu0 0
        %353 = vmatprep.subr.bf16.mxu0 0
        %354 = vmatpush1.bf16.xpose.msra.mxu0 0
        %355 = vmatprep.subr.bf16.mxu0 0
        %356 = vmatpush1.bf16.xpose.msra.mxu0 0
        %357 = vmatprep.subr.bf16.mxu0 0
        %358 = vmatpush1.bf16.xpose.msra.mxu0 0
        %359 = vmatprep.subr.bf16.mxu0 0
        %360 = vmatpush1.bf16.xpose.msra.mxu0 0
        %361 = vmatprep.subr.bf16.mxu0 0
        %362 = vmatpush1.bf16.xpose.msra.mxu0 0
        %363 = vmatprep.subr.bf16.mxu0 0
        %364 = vmatpush1.bf16.xpose.msra.mxu0 0
        %365 = vmatprep.subr.bf16.mxu0 0
        %366 = vmatpush1.bf16.xpose.msra.mxu0 0
        %367 = vmatprep.mubr.bf16.mxu0 0
        %368 = vmatmul.mubr.bf16.gmra.mrb[0].mxu0 %v330
        %v369 = vpop.f32.mrb[0].mxu0
        %v370 = vadd.f32 0.0, %v369
        %v371 = vpop.f32.mrb[0].mxu0
        %v372 = vpop.f32.mrb[0].mxu0
        %v373 = vadd.f32 0.0, %v372
        %v374 = vpop.f32.mrb[0].mxu0
        %375 = vdwg.mxu0
        %vm376 = vcmask 130048
        %v377 = vsel %vm376, %v370, -inf
        %378 = vmax.xlane.f32.xlu0 %v377
        %v379 = vpop.xlane.xlu0 %378
        %v380 = vsel %vm376, %v373, -inf
        %381 = vmax.xlane.f32.xlu0 %v380
        %v382 = vpop.xlane.xlu0 %381
        %v383 = vsub.f32 %v370, %v379
        %v384 = vsub.f32 %v373, %v382
        %v385 = vmul.f32 %v383, 1.442695
        %v386 = vpow.pop %v385
        %v387 = vmul.f32 %v384, 1.442695
        %v388 = vpow.pop %v387
        %v389 = vsel %vm376, %v386, 0.0
        %390 = vadd.xlane.f32.xlu0 %v389
        %v391 = vpop.xlane.xlu0 %390
        %v392 = vsel %vm376, %v388, 0.0
        %393 = vadd.xlane.f32.xlu0 %v392
        %v394 = vpop.xlane.xlu0 %393
        %v395 = vrcp.pop %v391
        %v396 = vrcp.pop %v394
        %v397 = vmul.f32 %v386, %v395
        %v398 = vmul.f32 %v388, %v396
        %v399 = vpack.c.bf16 %v398, %v397
        %v401 = vsel %vm376, %v399, 0
        %403 = vmatprep.subr.bf16.mxu0 0
        %404 = vmatpush1.bf16.msra.mxu0 %v324
        %405 = vmatprep.subr.bf16.mxu0 0
        %406 = vmatpush1.bf16.msra.mxu0 0
        %407 = vmatprep.subr.bf16.mxu0 0
        %408 = vmatpush1.bf16.msra.mxu0 0
        %409 = vmatprep.subr.bf16.mxu0 0
        %410 = vmatpush1.bf16.msra.mxu0 0
        %411 = vmatprep.subr.bf16.mxu0 0
        %412 = vmatpush1.bf16.msra.mxu0 0
        %413 = vmatprep.subr.bf16.mxu0 0
        %414 = vmatpush1.bf16.msra.mxu0 0
        %415 = vmatprep.subr.bf16.mxu0 0
        %416 = vmatpush1.bf16.msra.mxu0 0
        %417 = vmatprep.subr.bf16.mxu0 0
        %418 = vmatpush1.bf16.msra.mxu0 0
        %419 = vmatprep.subr.bf16.mxu0 0
        %420 = vmatpush1.bf16.msra.mxu0 0
        %421 = vmatprep.subr.bf16.mxu0 0
        %422 = vmatpush1.bf16.msra.mxu0 0
        %423 = vmatprep.subr.bf16.mxu0 0
        %424 = vmatpush1.bf16.msra.mxu0 0
        %425 = vmatprep.subr.bf16.mxu0 0
        %426 = vmatpush1.bf16.msra.mxu0 0
        %427 = vmatprep.subr.bf16.mxu0 0
        %428 = vmatpush1.bf16.msra.mxu0 0
        %429 = vmatprep.subr.bf16.mxu0 0
        %430 = vmatpush1.bf16.msra.mxu0 0
        %431 = vmatprep.subr.bf16.mxu0 0
        %432 = vmatpush1.bf16.msra.mxu0 0
        %433 = vmatprep.subr.bf16.mxu0 0
        %434 = vmatpush1.bf16.msra.mxu0 0
        %435 = vmatprep.mubr.bf16.mxu0 0
        %436 = vmatmul.mubr.bf16.gmra.mrb[0].mxu0 %v401
        %v437 = vpop.f32.mrb[0].mxu0
        %v438 = vadd.f32 0.0, %v437
        %v439 = vpop.f32.mrb[0].mxu0
        %v440 = vpop.f32.mrb[0].mxu0
        %v441 = vadd.f32 0.0, %v440
        %v442 = vpop.f32.mrb[0].mxu0
        %443 = vdwg.mxu0
        %445 = vrot.lane.b32.xlu0 %v322, 120
        %v446 = vpop.permute.xlu0 %445
        %447 = vrot.lane.b32.xlu0 %v323, 56
        %v448 = vpop.permute.xlu0 %447
        %v450 = vsel %vm328, %v446, 0
        %v453 = vsel %vm328, %v448, 0
        %455 = vmatprep.subr.bf16.mxu0 0
        %456 = vmatpush1.bf16.xpose.msra.mxu0 %v453
        %457 = vmatprep.subr.bf16.mxu0 0
        %458 = vmatpush1.bf16.xpose.msra.mxu0 0
        %459 = vmatprep.subr.bf16.mxu0 0
        %460 = vmatpush1.bf16.xpose.msra.mxu0 0
        %461 = vmatprep.subr.bf16.mxu0 0
        %462 = vmatpush1.bf16.xpose.msra.mxu0 0
        %463 = vmatprep.subr.bf16.mxu0 0
        %464 = vmatpush1.bf16.xpose.msra.mxu0 0
        %465 = vmatprep.subr.bf16.mxu0 0
        %466 = vmatpush1.bf16.xpose.msra.mxu0 0
        %467 = vmatprep.subr.bf16.mxu0 0
        %468 = vmatpush1.bf16.xpose.msra.mxu0 0
        %469 = vmatprep.subr.bf16.mxu0 0
        %470 = vmatpush1.bf16.xpose.msra.mxu0 0
        %471 = vmatprep.subr.bf16.mxu0 0
        %472 = vmatpush1.bf16.xpose.msra.mxu0 0
        %473 = vmatprep.subr.bf16.mxu0 0
        %474 = vmatpush1.bf16.xpose.msra.mxu0 0
        %475 = vmatprep.subr.bf16.mxu0 0
        %476 = vmatpush1.bf16.xpose.msra.mxu0 0
        %477 = vmatprep.subr.bf16.mxu0 0
        %478 = vmatpush1.bf16.xpose.msra.mxu0 0
        %479 = vmatprep.subr.bf16.mxu0 0
        %480 = vmatpush1.bf16.xpose.msra.mxu0 0
        %481 = vmatprep.subr.bf16.mxu0 0
        %482 = vmatpush1.bf16.xpose.msra.mxu0 0
        %483 = vmatprep.subr.bf16.mxu0 0
        %484 = vmatpush1.bf16.xpose.msra.mxu0 0
        %485 = vmatprep.subr.bf16.mxu0 0
        %486 = vmatpush1.bf16.xpose.msra.mxu0 0
        %487 = vmatprep.mubr.bf16.mxu0 0
        %488 = vmatmul.mubr.bf16.gmra.mrb[0].mxu0 %v450
        %v489 = vpop.f32.mrb[0].mxu0
        %v490 = vadd.f32 0.0, %v489
        %v491 = vpop.f32.mrb[0].mxu0
        %v492 = vpop.f32.mrb[0].mxu0
        %v493 = vadd.f32 0.0, %v492
        %v494 = vpop.f32.mrb[0].mxu0
        %495 = vdwg.mxu0
        %v496 = vsel %vm376, %v490, -inf
        %497 = vmax.xlane.f32.xlu0 %v496
        %v498 = vpop.xlane.xlu0 %497
        %v499 = vsel %vm376, %v493, -inf
        %500 = vmax.xlane.f32.xlu0 %v499
        %v501 = vpop.xlane.xlu0 %500
        %v502 = vsub.f32 %v490, %v498
        %v503 = vsub.f32 %v493, %v501
        %v504 = vmul.f32 %v502, 1.442695
        %v505 = vpow.pop %v504
        %v506 = vmul.f32 %v503, 1.442695
        %v507 = vpow.pop %v506
        %v508 = vsel %vm376, %v505, 0.0
        %509 = vadd.xlane.f32.xlu0 %v508
        %v510 = vpop.xlane.xlu0 %509
        %v511 = vsel %vm376, %v507, 0.0
        %512 = vadd.xlane.f32.xlu0 %v511
        %v513 = vpop.xlane.xlu0 %512
        %v514 = vrcp.pop %v510
        %v515 = vrcp.pop %v513
        %v516 = vmul.f32 %v505, %v514
        %v517 = vmul.f32 %v507, %v515
        %v518 = vpack.c.bf16 %v517, %v516
        %520 = vrot.lane.b32.xlu0 %v324, 120
        %v521 = vpop.permute.xlu0 %520
        %v524 = vsel %vm376, %v518, 0
        %526 = vmatprep.subr.bf16.mxu0 0
        %527 = vmatpush1.bf16.msra.mxu0 %v521
        %528 = vmatprep.subr.bf16.mxu0 0
        %529 = vmatpush1.bf16.msra.mxu0 0
        %530 = vmatprep.subr.bf16.mxu0 0
        %531 = vmatpush1.bf16.msra.mxu0 0
        %532 = vmatprep.subr.bf16.mxu0 0
        %533 = vmatpush1.bf16.msra.mxu0 0
        %534 = vmatprep.subr.bf16.mxu0 0
        %535 = vmatpush1.bf16.msra.mxu0 0
        %536 = vmatprep.subr.bf16.mxu0 0
        %537 = vmatpush1.bf16.msra.mxu0 0
        %538 = vmatprep.subr.bf16.mxu0 0
        %539 = vmatpush1.bf16.msra.mxu0 0
        %540 = vmatprep.subr.bf16.mxu0 0
        %541 = vmatpush1.bf16.msra.mxu0 0
        %542 = vmatprep.subr.bf16.mxu0 0
        %543 = vmatpush1.bf16.msra.mxu0 0
        %544 = vmatprep.subr.bf16.mxu0 0
        %545 = vmatpush1.bf16.msra.mxu0 0
        %546 = vmatprep.subr.bf16.mxu0 0
        %547 = vmatpush1.bf16.msra.mxu0 0
        %548 = vmatprep.subr.bf16.mxu0 0
        %549 = vmatpush1.bf16.msra.mxu0 0
        %550 = vmatprep.subr.bf16.mxu0 0
        %551 = vmatpush1.bf16.msra.mxu0 0
        %552 = vmatprep.subr.bf16.mxu0 0
        %553 = vmatpush1.bf16.msra.mxu0 0
        %554 = vmatprep.subr.bf16.mxu0 0
        %555 = vmatpush1.bf16.msra.mxu0 0
        %556 = vmatprep.subr.bf16.mxu0 0
        %557 = vmatpush1.bf16.msra.mxu0 0
        %558 = vmatprep.mubr.bf16.mxu0 0
        %559 = vmatmul.mubr.bf16.gmra.mrb[0].mxu0 %v524
        %v560 = vpop.f32.mrb[0].mxu0
        %v561 = vadd.f32 0.0, %v560
        %v562 = vpop.f32.mrb[0].mxu0
        %v563 = vpop.f32.mrb[0].mxu0
        %v564 = vadd.f32 0.0, %v563
        %v565 = vpop.f32.mrb[0].mxu0
        %566 = vdwg.mxu0
        %567 = vrot.lane.b32.xlu0 %v322, 112
        %v568 = vpop.permute.xlu0 %567
        %569 = vrot.lane.b32.xlu0 %v323, 48
        %v570 = vpop.permute.xlu0 %569
        %v572 = vsel %vm328, %v568, 0
        %v575 = vsel %vm328, %v570, 0
        %577 = vmatprep.subr.bf16.mxu0 0
        %578 = vmatpush1.bf16.xpose.msra.mxu0 %v575
        %579 = vmatprep.subr.bf16.mxu0 0
        %580 = vmatpush1.bf16.xpose.msra.mxu0 0
        %581 = vmatprep.subr.bf16.mxu0 0
        %582 = vmatpush1.bf16.xpose.msra.mxu0 0
        %583 = vmatprep.subr.bf16.mxu0 0
        %584 = vmatpush1.bf16.xpose.msra.mxu0 0
        %585 = vmatprep.subr.bf16.mxu0 0
        %586 = vmatpush1.bf16.xpose.msra.mxu0 0
        %587 = vmatprep.subr.bf16.mxu0 0
        %588 = vmatpush1.bf16.xpose.msra.mxu0 0
        %589 = vmatprep.subr.bf16.mxu0 0
        %590 = vmatpush1.bf16.xpose.msra.mxu0 0
        %591 = vmatprep.subr.bf16.mxu0 0
        %592 = vmatpush1.bf16.xpose.msra.mxu0 0
        %593 = vmatprep.subr.bf16.mxu0 0
        %594 = vmatpush1.bf16.xpose.msra.mxu0 0
        %595 = vmatprep.subr.bf16.mxu0 0
        %596 = vmatpush1.bf16.xpose.msra.mxu0 0
        %597 = vmatprep.subr.bf16.mxu0 0
        %598 = vmatpush1.bf16.xpose.msra.mxu0 0
        %599 = vmatprep.subr.bf16.mxu0 0
        %600 = vmatpush1.bf16.xpose.msra.mxu0 0
        %601 = vmatprep.subr.bf16.mxu0 0
        %602 = vmatpush1.bf16.xpose.msra.mxu0 0
        %603 = vmatprep.subr.bf16.mxu0 0
        %604 = vmatpush1.bf16.xpose.msra.mxu0 0
        %605 = vmatprep.subr.bf16.mxu0 0
        %606 = vmatpush1.bf16.xpose.msra.mxu0 0
        %607 = vmatprep.subr.bf16.mxu0 0
        %608 = vmatpush1.bf16.xpose.msra.mxu0 0
        %609 = vmatprep.mubr.bf16.mxu0 0
        %610 = vmatmul.mubr.bf16.gmra.mrb[0].mxu0 %v572
        %v611 = vpop.f32.mrb[0].mxu0
        %v612 = vadd.f32 0.0, %v611
        %v613 = vpop.f32.mrb[0].mxu0
        %v614 = vpop.f32.mrb[0].mxu0
        %v615 = vadd.f32 0.0, %v614
        %v616 = vpop.f32.mrb[0].mxu0
        %617 = vdwg.mxu0
        %v618 = vsel %vm376, %v612, -inf
        %619 = vmax.xlane.f32.xlu0 %v618
        %v620 = vpop.xlane.xlu0 %619
        %v621 = vsel %vm376, %v615, -inf
        %622 = vmax.xlane.f32.xlu0 %v621
        %v623 = vpop.xlane.xlu0 %622
        %v624 = vsub.f32 %v612, %v620
        %v625 = vsub.f32 %v615, %v623
        %v626 = vmul.f32 %v624, 1.442695
        %v627 = vpow.pop %v626
        %v628 = vmul.f32 %v625, 1.442695
        %v629 = vpow.pop %v628
        %v630 = vsel %vm376, %v627, 0.0
        %631 = vadd.xlane.f32.xlu0 %v630
        %v632 = vpop.xlane.xlu0 %631
        %v633 = vsel %vm376, %v629, 0.0
        %634 = vadd.xlane.f32.xlu0 %v633
        %v635 = vpop.xlane.xlu0 %634
        %v636 = vrcp.pop %v632
        %v637 = vrcp.pop %v635
        %v638 = vmul.f32 %v627, %v636
        %v639 = vmul.f32 %v629, %v637
        %v640 = vpack.c.bf16 %v639, %v638
        %641 = vrot.lane.b32.xlu0 %v324, 112
        %v642 = vpop.permute.xlu0 %641
        %v645 = vsel %vm376, %v640, 0
        %647 = vmatprep.subr.bf16.mxu0 0
        %648 = vmatpush1.bf16.msra.mxu0 %v642
        %649 = vmatprep.subr.bf16.mxu0 0
        %650 = vmatpush1.bf16.msra.mxu0 0
        %651 = vmatprep.subr.bf16.mxu0 0
        %652 = vmatpush1.bf16.msra.mxu0 0
        %653 = vmatprep.subr.bf16.mxu0 0
        %654 = vmatpush1.bf16.msra.mxu0 0
        %655 = vmatprep.subr.bf16.mxu0 0
        %656 = vmatpush1.bf16.msra.mxu0 0
        %657 = vmatprep.subr.bf16.mxu0 0
        %658 = vmatpush1.bf16.msra.mxu0 0
        %659 = vmatprep.subr.bf16.mxu0 0
        %660 = vmatpush1.bf16.msra.mxu0 0
        %661 = vmatprep.subr.bf16.mxu0 0
        %662 = vmatpush1.bf16.msra.mxu0 0
        %663 = vmatprep.subr.bf16.mxu0 0
        %664 = vmatpush1.bf16.msra.mxu0 0
        %665 = vmatprep.subr.bf16.mxu0 0
        %666 = vmatpush1.bf16.msra.mxu0 0
        %667 = vmatprep.subr.bf16.mxu0 0
        %668 = vmatpush1.bf16.msra.mxu0 0
        %669 = vmatprep.subr.bf16.mxu0 0
        %670 = vmatpush1.bf16.msra.mxu0 0
        %671 = vmatprep.subr.bf16.mxu0 0
        %672 = vmatpush1.bf16.msra.mxu0 0
        %673 = vmatprep.subr.bf16.mxu0 0
        %674 = vmatpush1.bf16.msra.mxu0 0
        %675 = vmatprep.subr.bf16.mxu0 0
        %676 = vmatpush1.bf16.msra.mxu0 0
        %677 = vmatprep.subr.bf16.mxu0 0
        %678 = vmatpush1.bf16.msra.mxu0 0
        %679 = vmatprep.mubr.bf16.mxu0 0
        %680 = vmatmul.mubr.bf16.gmra.mrb[0].mxu0 %v645
        %v681 = vpop.f32.mrb[0].mxu0
        %v682 = vadd.f32 0.0, %v681
        %v683 = vpop.f32.mrb[0].mxu0
        %v684 = vpop.f32.mrb[0].mxu0
        %v685 = vadd.f32 0.0, %v684
        %v686 = vpop.f32.mrb[0].mxu0
        %687 = vdwg.mxu0
        %688 = vrot.lane.b32.xlu0 %v322, 104
        %v689 = vpop.permute.xlu0 %688
        %690 = vrot.lane.b32.xlu0 %v323, 40
        %v691 = vpop.permute.xlu0 %690
        %v693 = vsel %vm328, %v689, 0
        %v696 = vsel %vm328, %v691, 0
        %698 = vmatprep.subr.bf16.mxu0 0
        %699 = vmatpush1.bf16.xpose.msra.mxu0 %v696
        %700 = vmatprep.subr.bf16.mxu0 0
        %701 = vmatpush1.bf16.xpose.msra.mxu0 0
        %702 = vmatprep.subr.bf16.mxu0 0
        %703 = vmatpush1.bf16.xpose.msra.mxu0 0
        %704 = vmatprep.subr.bf16.mxu0 0
        %705 = vmatpush1.bf16.xpose.msra.mxu0 0
        %706 = vmatprep.subr.bf16.mxu0 0
        %707 = vmatpush1.bf16.xpose.msra.mxu0 0
        %708 = vmatprep.subr.bf16.mxu0 0
        %709 = vmatpush1.bf16.xpose.msra.mxu0 0
        %710 = vmatprep.subr.bf16.mxu0 0
        %711 = vmatpush1.bf16.xpose.msra.mxu0 0
        %712 = vmatprep.subr.bf16.mxu0 0
        %713 = vmatpush1.bf16.xpose.msra.mxu0 0
        %714 = vmatprep.subr.bf16.mxu0 0
        %715 = vmatpush1.bf16.xpose.msra.mxu0 0
        %716 = vmatprep.subr.bf16.mxu0 0
        %717 = vmatpush1.bf16.xpose.msra.mxu0 0
        %718 = vmatprep.subr.bf16.mxu0 0
        %719 = vmatpush1.bf16.xpose.msra.mxu0 0
        %720 = vmatprep.subr.bf16.mxu0 0
        %721 = vmatpush1.bf16.xpose.msra.mxu0 0
        %722 = vmatprep.subr.bf16.mxu0 0
        %723 = vmatpush1.bf16.xpose.msra.mxu0 0
        %724 = vmatprep.subr.bf16.mxu0 0
        %725 = vmatpush1.bf16.xpose.msra.mxu0 0
        %726 = vmatprep.subr.bf16.mxu0 0
        %727 = vmatpush1.bf16.xpose.msra.mxu0 0
        %728 = vmatprep.subr.bf16.mxu0 0
        %729 = vmatpush1.bf16.xpose.msra.mxu0 0
        %730 = vmatprep.mubr.bf16.mxu0 0
        %731 = vmatmul.mubr.bf16.gmra.mrb[0].mxu0 %v693
        %v732 = vpop.f32.mrb[0].mxu0
        %v733 = vadd.f32 0.0, %v732
        %v734 = vpop.f32.mrb[0].mxu0
        %v735 = vpop.f32.mrb[0].mxu0
        %v736 = vadd.f32 0.0, %v735
        %v737 = vpop.f32.mrb[0].mxu0
        %738 = vdwg.mxu0
        %v739 = vsel %vm376, %v733, -inf
        %740 = vmax.xlane.f32.xlu0 %v739
        %v741 = vpop.xlane.xlu0 %740
        %v742 = vsel %vm376, %v736, -inf
        %743 = vmax.xlane.f32.xlu0 %v742
        %v744 = vpop.xlane.xlu0 %743
        %v745 = vsub.f32 %v733, %v741
        %v746 = vsub.f32 %v736, %v744
        %v747 = vmul.f32 %v745, 1.442695
        %v748 = vpow.pop %v747
        %v749 = vmul.f32 %v746, 1.442695
        %v750 = vpow.pop %v749
        %v751 = vsel %vm376, %v748, 0.0
        %752 = vadd.xlane.f32.xlu0 %v751
        %v753 = vpop.xlane.xlu0 %752
        %v754 = vsel %vm376, %v750, 0.0
        %755 = vadd.xlane.f32.xlu0 %v754
        %v756 = vpop.xlane.xlu0 %755
        %v757 = vrcp.pop %v753
        %v758 = vrcp.pop %v756
        %v759 = vmul.f32 %v748, %v757
        %v760 = vmul.f32 %v750, %v758
        %v761 = vpack.c.bf16 %v760, %v759
        %762 = vrot.lane.b32.xlu0 %v324, 104
        %v763 = vpop.permute.xlu0 %762
        %v766 = vsel %vm376, %v761, 0
        %768 = vmatprep.subr.bf16.mxu0 0
        %769 = vmatpush1.bf16.msra.mxu0 %v763
        %770 = vmatprep.subr.bf16.mxu0 0
        %771 = vmatpush1.bf16.msra.mxu0 0
        %772 = vmatprep.subr.bf16.mxu0 0
        %773 = vmatpush1.bf16.msra.mxu0 0
        %774 = vmatprep.subr.bf16.mxu0 0
        %775 = vmatpush1.bf16.msra.mxu0 0
        %776 = vmatprep.subr.bf16.mxu0 0
        %777 = vmatpush1.bf16.msra.mxu0 0
        %778 = vmatprep.subr.bf16.mxu0 0
        %779 = vmatpush1.bf16.msra.mxu0 0
        %780 = vmatprep.subr.bf16.mxu0 0
        %781 = vmatpush1.bf16.msra.mxu0 0
        %782 = vmatprep.subr.bf16.mxu0 0
        %783 = vmatpush1.bf16.msra.mxu0 0
        %784 = vmatprep.subr.bf16.mxu0 0
        %785 = vmatpush1.bf16.msra.mxu0 0
        %786 = vmatprep.subr.bf16.mxu0 0
        %787 = vmatpush1.bf16.msra.mxu0 0
        %788 = vmatprep.subr.bf16.mxu0 0
        %789 = vmatpush1.bf16.msra.mxu0 0
        %790 = vmatprep.subr.bf16.mxu0 0
        %791 = vmatpush1.bf16.msra.mxu0 0
        %792 = vmatprep.subr.bf16.mxu0 0
        %793 = vmatpush1.bf16.msra.mxu0 0
        %794 = vmatprep.subr.bf16.mxu0 0
        %795 = vmatpush1.bf16.msra.mxu0 0
        %796 = vmatprep.subr.bf16.mxu0 0
        %797 = vmatpush1.bf16.msra.mxu0 0
        %798 = vmatprep.subr.bf16.mxu0 0
        %799 = vmatpush1.bf16.msra.mxu0 0
        %800 = vmatprep.mubr.bf16.mxu0 0
        %801 = vmatmul.mubr.bf16.gmra.mrb[0].mxu0 %v766
        %v802 = vpop.f32.mrb[0].mxu0
        %v803 = vadd.f32 0.0, %v802
        %v804 = vpop.f32.mrb[0].mxu0
        %v805 = vpop.f32.mrb[0].mxu0
        %v806 = vadd.f32 0.0, %v805
        %v807 = vpop.f32.mrb[0].mxu0
        %808 = vdwg.mxu0
        %809 = vrot.lane.b32.xlu0 %v322, 96
        %v810 = vpop.permute.xlu0 %809
        %811 = vrot.lane.b32.xlu0 %v323, 32
        %v812 = vpop.permute.xlu0 %811
        %v814 = vsel %vm328, %v810, 0
        %v817 = vsel %vm328, %v812, 0
        %819 = vmatprep.subr.bf16.mxu0 0
        %820 = vmatpush1.bf16.xpose.msra.mxu0 %v817
        %821 = vmatprep.subr.bf16.mxu0 0
        %822 = vmatpush1.bf16.xpose.msra.mxu0 0
        %823 = vmatprep.subr.bf16.mxu0 0
        %824 = vmatpush1.bf16.xpose.msra.mxu0 0
        %825 = vmatprep.subr.bf16.mxu0 0
        %826 = vmatpush1.bf16.xpose.msra.mxu0 0
        %827 = vmatprep.subr.bf16.mxu0 0
        %828 = vmatpush1.bf16.xpose.msra.mxu0 0
        %829 = vmatprep.subr.bf16.mxu0 0
        %830 = vmatpush1.bf16.xpose.msra.mxu0 0
        %831 = vmatprep.subr.bf16.mxu0 0
        %832 = vmatpush1.bf16.xpose.msra.mxu0 0
        %833 = vmatprep.subr.bf16.mxu0 0
        %834 = vmatpush1.bf16.xpose.msra.mxu0 0
        %835 = vmatprep.subr.bf16.mxu0 0
        %836 = vmatpush1.bf16.xpose.msra.mxu0 0
        %837 = vmatprep.subr.bf16.mxu0 0
        %838 = vmatpush1.bf16.xpose.msra.mxu0 0
        %839 = vmatprep.subr.bf16.mxu0 0
        %840 = vmatpush1.bf16.xpose.msra.mxu0 0
        %841 = vmatprep.subr.bf16.mxu0 0
        %842 = vmatpush1.bf16.xpose.msra.mxu0 0
        %843 = vmatprep.subr.bf16.mxu0 0
        %844 = vmatpush1.bf16.xpose.msra.mxu0 0
        %845 = vmatprep.subr.bf16.mxu0 0
        %846 = vmatpush1.bf16.xpose.msra.mxu0 0
        %847 = vmatprep.subr.bf16.mxu0 0
        %848 = vmatpush1.bf16.xpose.msra.mxu0 0
        %849 = vmatprep.subr.bf16.mxu0 0
        %850 = vmatpush1.bf16.xpose.msra.mxu0 0
        %851 = vmatprep.mubr.bf16.mxu0 0
        %852 = vmatmul.mubr.bf16.gmra.mrb[0].mxu0 %v814
        %v853 = vpop.f32.mrb[0].mxu0
        %v854 = vadd.f32 0.0, %v853
        %v855 = vpop.f32.mrb[0].mxu0
        %v856 = vpop.f32.mrb[0].mxu0
        %v857 = vadd.f32 0.0, %v856
        %v858 = vpop.f32.mrb[0].mxu0
        %859 = vdwg.mxu0
        %v860 = vsel %vm376, %v854, -inf
        %861 = vmax.xlane.f32.xlu0 %v860
        %v862 = vpop.xlane.xlu0 %861
        %v863 = vsel %vm376, %v857, -inf
        %864 = vmax.xlane.f32.xlu0 %v863
        %v865 = vpop.xlane.xlu0 %864
        %v866 = vsub.f32 %v854, %v862
        %v867 = vsub.f32 %v857, %v865
        %v868 = vmul.f32 %v866, 1.442695
        %v869 = vpow.pop %v868
        %v870 = vmul.f32 %v867, 1.442695
        %v871 = vpow.pop %v870
        %v872 = vsel %vm376, %v869, 0.0
        %873 = vadd.xlane.f32.xlu0 %v872
        %v874 = vpop.xlane.xlu0 %873
        %v875 = vsel %vm376, %v871, 0.0
        %876 = vadd.xlane.f32.xlu0 %v875
        %v877 = vpop.xlane.xlu0 %876
        %v878 = vrcp.pop %v874
        %v879 = vrcp.pop %v877
        %v880 = vmul.f32 %v869, %v878
        %v881 = vmul.f32 %v871, %v879
        %v882 = vpack.c.bf16 %v881, %v880
        %883 = vrot.lane.b32.xlu0 %v324, 96
        %v884 = vpop.permute.xlu0 %883
        %v887 = vsel %vm376, %v882, 0
        %889 = vmatprep.subr.bf16.mxu0 0
        %890 = vmatpush1.bf16.msra.mxu0 %v884
        %891 = vmatprep.subr.bf16.mxu0 0
        %892 = vmatpush1.bf16.msra.mxu0 0
        %893 = vmatprep.subr.bf16.mxu0 0
        %894 = vmatpush1.bf16.msra.mxu0 0
        %895 = vmatprep.subr.bf16.mxu0 0
        %896 = vmatpush1.bf16.msra.mxu0 0
        %897 = vmatprep.subr.bf16.mxu0 0
        %898 = vmatpush1.bf16.msra.mxu0 0
        %899 = vmatprep.subr.bf16.mxu0 0
        %900 = vmatpush1.bf16.msra.mxu0 0
        %901 = vmatprep.subr.bf16.mxu0 0
        %902 = vmatpush1.bf16.msra.mxu0 0
        %903 = vmatprep.subr.bf16.mxu0 0
        %904 = vmatpush1.bf16.msra.mxu0 0
        %905 = vmatprep.subr.bf16.mxu0 0
        %906 = vmatpush1.bf16.msra.mxu0 0
        %907 = vmatprep.subr.bf16.mxu0 0
        %908 = vmatpush1.bf16.msra.mxu0 0
        %909 = vmatprep.subr.bf16.mxu0 0
        %910 = vmatpush1.bf16.msra.mxu0 0
        %911 = vmatprep.subr.bf16.mxu0 0
        %912 = vmatpush1.bf16.msra.mxu0 0
        %913 = vmatprep.subr.bf16.mxu0 0
        %914 = vmatpush1.bf16.msra.mxu0 0
        %915 = vmatprep.subr.bf16.mxu0 0
        %916 = vmatpush1.bf16.msra.mxu0 0
        %917 = vmatprep.subr.bf16.mxu0 0
        %918 = vmatpush1.bf16.msra.mxu0 0
        %919 = vmatprep.subr.bf16.mxu0 0
        %920 = vmatpush1.bf16.msra.mxu0 0
        %921 = vmatprep.mubr.bf16.mxu0 0
        %922 = vmatmul.mubr.bf16.gmra.mrb[0].mxu0 %v887
        %v923 = vpop.f32.mrb[0].mxu0
        %v924 = vadd.f32 0.0, %v923
        %v925 = vpop.f32.mrb[0].mxu0
        %v926 = vpop.f32.mrb[0].mxu0
        %v927 = vadd.f32 0.0, %v926
        %v928 = vpop.f32.mrb[0].mxu0
        %929 = vdwg.mxu0
        %930 = vrot.lane.b32.xlu0 %v322, 88
        %v931 = vpop.permute.xlu0 %930
        %932 = vrot.lane.b32.xlu0 %v323, 24
        %v933 = vpop.permute.xlu0 %932
        %v935 = vsel %vm328, %v931, 0
        %v938 = vsel %vm328, %v933, 0
        %940 = vmatprep.subr.bf16.mxu0 0
        %941 = vmatpush1.bf16.xpose.msra.mxu0 %v938
        %942 = vmatprep.subr.bf16.mxu0 0
        %943 = vmatpush1.bf16.xpose.msra.mxu0 0
        %944 = vmatprep.subr.bf16.mxu0 0
        %945 = vmatpush1.bf16.xpose.msra.mxu0 0
        %946 = vmatprep.subr.bf16.mxu0 0
        %947 = vmatpush1.bf16.xpose.msra.mxu0 0
        %948 = vmatprep.subr.bf16.mxu0 0
        %949 = vmatpush1.bf16.xpose.msra.mxu0 0
        %950 = vmatprep.subr.bf16.mxu0 0
        %951 = vmatpush1.bf16.xpose.msra.mxu0 0
        %952 = vmatprep.subr.bf16.mxu0 0
        %953 = vmatpush1.bf16.xpose.msra.mxu0 0
        %954 = vmatprep.subr.bf16.mxu0 0
        %955 = vmatpush1.bf16.xpose.msra.mxu0 0
        %956 = vmatprep.subr.bf16.mxu0 0
        %957 = vmatpush1.bf16.xpose.msra.mxu0 0
        %958 = vmatprep.subr.bf16.mxu0 0
        %959 = vmatpush1.bf16.xpose.msra.mxu0 0
        %960 = vmatprep.subr.bf16.mxu0 0
        %961 = vmatpush1.bf16.xpose.msra.mxu0 0
        %962 = vmatprep.subr.bf16.mxu0 0
        %963 = vmatpush1.bf16.xpose.msra.mxu0 0
        %964 = vmatprep.subr.bf16.mxu0 0
        %965 = vmatpush1.bf16.xpose.msra.mxu0 0
        %966 = vmatprep.subr.bf16.mxu0 0
        %967 = vmatpush1.bf16.xpose.msra.mxu0 0
        %968 = vmatprep.subr.bf16.mxu0 0
        %969 = vmatpush1.bf16.xpose.msra.mxu0 0
        %970 = vmatprep.subr.bf16.mxu0 0
        %971 = vmatpush1.bf16.xpose.msra.mxu0 0
        %972 = vmatprep.mubr.bf16.mxu0 0
        %973 = vmatmul.mubr.bf16.gmra.mrb[0].mxu0 %v935
        %v974 = vpop.f32.mrb[0].mxu0
        %v975 = vadd.f32 0.0, %v974
        %v976 = vpop.f32.mrb[0].mxu0
        %v977 = vpop.f32.mrb[0].mxu0
        %v978 = vadd.f32 0.0, %v977
        %v979 = vpop.f32.mrb[0].mxu0
        %980 = vdwg.mxu0
        %v981 = vsel %vm376, %v975, -inf
        %982 = vmax.xlane.f32.xlu0 %v981
        %v983 = vpop.xlane.xlu0 %982
        %v984 = vsel %vm376, %v978, -inf
        %985 = vmax.xlane.f32.xlu0 %v984
        %v986 = vpop.xlane.xlu0 %985
        %v987 = vsub.f32 %v975, %v983
        %v988 = vsub.f32 %v978, %v986
        %v989 = vmul.f32 %v987, 1.442695
        %v990 = vpow.pop %v989
        %v991 = vmul.f32 %v988, 1.442695
        %v992 = vpow.pop %v991
        %v993 = vsel %vm376, %v990, 0.0
        %994 = vadd.xlane.f32.xlu0 %v993
        %v995 = vpop.xlane.xlu0 %994
        %v996 = vsel %vm376, %v992, 0.0
        %997 = vadd.xlane.f32.xlu0 %v996
        %v998 = vpop.xlane.xlu0 %997
        %v999 = vrcp.pop %v995
        %v1000 = vrcp.pop %v998
        %v1001 = vmul.f32 %v990, %v999
        %v1002 = vmul.f32 %v992, %v1000
        %v1003 = vpack.c.bf16 %v1002, %v1001
        %1004 = vrot.lane.b32.xlu0 %v324, 88
        %v1005 = vpop.permute.xlu0 %1004
        %v1008 = vsel %vm376, %v1003, 0
        %1010 = vmatprep.subr.bf16.mxu0 0
        %1011 = vmatpush1.bf16.msra.mxu0 %v1005
        %1012 = vmatprep.subr.bf16.mxu0 0
        %1013 = vmatpush1.bf16.msra.mxu0 0
        %1014 = vmatprep.subr.bf16.mxu0 0
        %1015 = vmatpush1.bf16.msra.mxu0 0
        %1016 = vmatprep.subr.bf16.mxu0 0
        %1017 = vmatpush1.bf16.msra.mxu0 0
        %1018 = vmatprep.subr.bf16.mxu0 0
        %1019 = vmatpush1.bf16.msra.mxu0 0
        %1020 = vmatprep.subr.bf16.mxu0 0
        %1021 = vmatpush1.bf16.msra.mxu0 0
        %1022 = vmatprep.subr.bf16.mxu0 0
        %1023 = vmatpush1.bf16.msra.mxu0 0
        %1024 = vmatprep.subr.bf16.mxu0 0
        %1025 = vmatpush1.bf16.msra.mxu0 0
        %1026 = vmatprep.subr.bf16.mxu0 0
        %1027 = vmatpush1.bf16.msra.mxu0 0
        %1028 = vmatprep.subr.bf16.mxu0 0
        %1029 = vmatpush1.bf16.msra.mxu0 0
        %1030 = vmatprep.subr.bf16.mxu0 0
        %1031 = vmatpush1.bf16.msra.mxu0 0
        %1032 = vmatprep.subr.bf16.mxu0 0
        %1033 = vmatpush1.bf16.msra.mxu0 0
        %1034 = vmatprep.subr.bf16.mxu0 0
        %1035 = vmatpush1.bf16.msra.mxu0 0
        %1036 = vmatprep.subr.bf16.mxu0 0
        %1037 = vmatpush1.bf16.msra.mxu0 0
        %1038 = vmatprep.subr.bf16.mxu0 0
        %1039 = vmatpush1.bf16.msra.mxu0 0
        %1040 = vmatprep.subr.bf16.mxu0 0
        %1041 = vmatpush1.bf16.msra.mxu0 0
        %1042 = vmatprep.mubr.bf16.mxu0 0
        %1043 = vmatmul.mubr.bf16.gmra.mrb[0].mxu0 %v1008
        %v1044 = vpop.f32.mrb[0].mxu0
        %v1045 = vadd.f32 0.0, %v1044
        %v1046 = vpop.f32.mrb[0].mxu0
        %v1047 = vpop.f32.mrb[0].mxu0
        %v1048 = vadd.f32 0.0, %v1047
        %v1049 = vpop.f32.mrb[0].mxu0
        %1050 = vdwg.mxu0
        %1051 = vrot.lane.b32.xlu0 %v322, 80
        %v1052 = vpop.permute.xlu0 %1051
        %1053 = vrot.lane.b32.xlu0 %v323, 16
        %v1054 = vpop.permute.xlu0 %1053
        %v1056 = vsel %vm328, %v1052, 0
        %v1059 = vsel %vm328, %v1054, 0
        %1061 = vmatprep.subr.bf16.mxu0 0
        %1062 = vmatpush1.bf16.xpose.msra.mxu0 %v1059
        %1063 = vmatprep.subr.bf16.mxu0 0
        %1064 = vmatpush1.bf16.xpose.msra.mxu0 0
        %1065 = vmatprep.subr.bf16.mxu0 0
        %1066 = vmatpush1.bf16.xpose.msra.mxu0 0
        %1067 = vmatprep.subr.bf16.mxu0 0
        %1068 = vmatpush1.bf16.xpose.msra.mxu0 0
        %1069 = vmatprep.subr.bf16.mxu0 0
        %1070 = vmatpush1.bf16.xpose.msra.mxu0 0
        %1071 = vmatprep.subr.bf16.mxu0 0
        %1072 = vmatpush1.bf16.xpose.msra.mxu0 0
        %1073 = vmatprep.subr.bf16.mxu0 0
        %1074 = vmatpush1.bf16.xpose.msra.mxu0 0
        %1075 = vmatprep.subr.bf16.mxu0 0
        %1076 = vmatpush1.bf16.xpose.msra.mxu0 0
        %1077 = vmatprep.subr.bf16.mxu0 0
        %1078 = vmatpush1.bf16.xpose.msra.mxu0 0
        %1079 = vmatprep.subr.bf16.mxu0 0
        %1080 = vmatpush1.bf16.xpose.msra.mxu0 0
        %1081 = vmatprep.subr.bf16.mxu0 0
        %1082 = vmatpush1.bf16.xpose.msra.mxu0 0
        %1083 = vmatprep.subr.bf16.mxu0 0
        %1084 = vmatpush1.bf16.xpose.msra.mxu0 0
        %1085 = vmatprep.subr.bf16.mxu0 0
        %1086 = vmatpush1.bf16.xpose.msra.mxu0 0
        %1087 = vmatprep.subr.bf16.mxu0 0
        %1088 = vmatpush1.bf16.xpose.msra.mxu0 0
        %1089 = vmatprep.subr.bf16.mxu0 0
        %1090 = vmatpush1.bf16.xpose.msra.mxu0 0
        %1091 = vmatprep.subr.bf16.mxu0 0
        %1092 = vmatpush1.bf16.xpose.msra.mxu0 0
        %1093 = vmatprep.mubr.bf16.mxu0 0
        %1094 = vmatmul.mubr.bf16.gmra.mrb[0].mxu0 %v1056
        %v1095 = vpop.f32.mrb[0].mxu0
        %v1096 = vadd.f32 0.0, %v1095
        %v1097 = vpop.f32.mrb[0].mxu0
        %v1098 = vpop.f32.mrb[0].mxu0
        %v1099 = vadd.f32 0.0, %v1098
        %v1100 = vpop.f32.mrb[0].mxu0
        %1101 = vdwg.mxu0
        %v1102 = vsel %vm376, %v1096, -inf
        %1103 = vmax.xlane.f32.xlu0 %v1102
        %v1104 = vpop.xlane.xlu0 %1103
        %v1105 = vsel %vm376, %v1099, -inf
        %1106 = vmax.xlane.f32.xlu0 %v1105
        %v1107 = vpop.xlane.xlu0 %1106
        %v1108 = vsub.f32 %v1096, %v1104
        %v1109 = vsub.f32 %v1099, %v1107
        %v1110 = vmul.f32 %v1108, 1.442695
        %v1111 = vpow.pop %v1110
        %v1112 = vmul.f32 %v1109, 1.442695
        %v1113 = vpow.pop %v1112
        %v1114 = vsel %vm376, %v1111, 0.0
        %1115 = vadd.xlane.f32.xlu0 %v1114
        %v1116 = vpop.xlane.xlu0 %1115
        %v1117 = vsel %vm376, %v1113, 0.0
        %1118 = vadd.xlane.f32.xlu0 %v1117
        %v1119 = vpop.xlane.xlu0 %1118
        %v1120 = vrcp.pop %v1116
        %v1121 = vrcp.pop %v1119
        %v1122 = vmul.f32 %v1111, %v1120
        %v1123 = vmul.f32 %v1113, %v1121
        %v1124 = vpack.c.bf16 %v1123, %v1122
        %1125 = vrot.lane.b32.xlu0 %v324, 80
        %v1126 = vpop.permute.xlu0 %1125
        %v1129 = vsel %vm376, %v1124, 0
        %1131 = vmatprep.subr.bf16.mxu0 0
        %1132 = vmatpush1.bf16.msra.mxu0 %v1126
        %1133 = vmatprep.subr.bf16.mxu0 0
        %1134 = vmatpush1.bf16.msra.mxu0 0
        %1135 = vmatprep.subr.bf16.mxu0 0
        %1136 = vmatpush1.bf16.msra.mxu0 0
        %1137 = vmatprep.subr.bf16.mxu0 0
        %1138 = vmatpush1.bf16.msra.mxu0 0
        %1139 = vmatprep.subr.bf16.mxu0 0
        %1140 = vmatpush1.bf16.msra.mxu0 0
        %1141 = vmatprep.subr.bf16.mxu0 0
        %1142 = vmatpush1.bf16.msra.mxu0 0
        %1143 = vmatprep.subr.bf16.mxu0 0
        %1144 = vmatpush1.bf16.msra.mxu0 0
        %1145 = vmatprep.subr.bf16.mxu0 0
        %1146 = vmatpush1.bf16.msra.mxu0 0
        %1147 = vmatprep.subr.bf16.mxu0 0
        %1148 = vmatpush1.bf16.msra.mxu0 0
        %1149 = vmatprep.subr.bf16.mxu0 0
        %1150 = vmatpush1.bf16.msra.mxu0 0
        %1151 = vmatprep.subr.bf16.mxu0 0
        %1152 = vmatpush1.bf16.msra.mxu0 0
        %1153 = vmatprep.subr.bf16.mxu0 0
        %1154 = vmatpush1.bf16.msra.mxu0 0
        %1155 = vmatprep.subr.bf16.mxu0 0
        %1156 = vmatpush1.bf16.msra.mxu0 0
        %1157 = vmatprep.subr.bf16.mxu0 0
        %1158 = vmatpush1.bf16.msra.mxu0 0
        %1159 = vmatprep.subr.bf16.mxu0 0
        %1160 = vmatpush1.bf16.msra.mxu0 0
        %1161 = vmatprep.subr.bf16.mxu0 0
        %1162 = vmatpush1.bf16.msra.mxu0 0
        %1163 = vmatprep.mubr.bf16.mxu0 0
        %1164 = vmatmul.mubr.bf16.gmra.mrb[0].mxu0 %v1129
        %v1165 = vpop.f32.mrb[0].mxu0
        %v1166 = vadd.f32 0.0, %v1165
        %v1167 = vpop.f32.mrb[0].mxu0
        %v1168 = vpop.f32.mrb[0].mxu0
        %v1169 = vadd.f32 0.0, %v1168
        %v1170 = vpop.f32.mrb[0].mxu0
        %1171 = vdwg.mxu0
        %1172 = vrot.lane.b32.xlu0 %v322, 72
        %v1173 = vpop.permute.xlu0 %1172
        %1174 = vrot.lane.b32.xlu0 %v323, 8
        %v1175 = vpop.permute.xlu0 %1174
        %v1177 = vsel %vm328, %v1173, 0
        %v1180 = vsel %vm328, %v1175, 0
        %1182 = vmatprep.subr.bf16.mxu0 0
        %1183 = vmatpush1.bf16.xpose.msra.mxu0 %v1180
        %1184 = vmatprep.subr.bf16.mxu0 0
        %1185 = vmatpush1.bf16.xpose.msra.mxu0 0
        %1186 = vmatprep.subr.bf16.mxu0 0
        %1187 = vmatpush1.bf16.xpose.msra.mxu0 0
        %1188 = vmatprep.subr.bf16.mxu0 0
        %1189 = vmatpush1.bf16.xpose.msra.mxu0 0
        %1190 = vmatprep.subr.bf16.mxu0 0
        %1191 = vmatpush1.bf16.xpose.msra.mxu0 0
        %1192 = vmatprep.subr.bf16.mxu0 0
        %1193 = vmatpush1.bf16.xpose.msra.mxu0 0
        %1194 = vmatprep.subr.bf16.mxu0 0
        %1195 = vmatpush1.bf16.xpose.msra.mxu0 0
        %1196 = vmatprep.subr.bf16.mxu0 0
        %1197 = vmatpush1.bf16.xpose.msra.mxu0 0
        %1198 = vmatprep.subr.bf16.mxu0 0
        %1199 = vmatpush1.bf16.xpose.msra.mxu0 0
        %1200 = vmatprep.subr.bf16.mxu0 0
        %1201 = vmatpush1.bf16.xpose.msra.mxu0 0
        %1202 = vmatprep.subr.bf16.mxu0 0
        %1203 = vmatpush1.bf16.xpose.msra.mxu0 0
        %1204 = vmatprep.subr.bf16.mxu0 0
        %1205 = vmatpush1.bf16.xpose.msra.mxu0 0
        %1206 = vmatprep.subr.bf16.mxu0 0
        %1207 = vmatpush1.bf16.xpose.msra.mxu0 0
        %1208 = vmatprep.subr.bf16.mxu0 0
        %1209 = vmatpush1.bf16.xpose.msra.mxu0 0
        %1210 = vmatprep.subr.bf16.mxu0 0
        %1211 = vmatpush1.bf16.xpose.msra.mxu0 0
        %1212 = vmatprep.subr.bf16.mxu0 0
        %1213 = vmatpush1.bf16.xpose.msra.mxu0 0
        %1214 = vmatprep.mubr.bf16.mxu0 0
        %1215 = vmatmul.mubr.bf16.gmra.mrb[0].mxu0 %v1177
        %v1216 = vpop.f32.mrb[0].mxu0
        %v1217 = vadd.f32 0.0, %v1216
        %v1218 = vpop.f32.mrb[0].mxu0
        %v1219 = vpop.f32.mrb[0].mxu0
        %v1220 = vadd.f32 0.0, %v1219
        %v1221 = vpop.f32.mrb[0].mxu0
        %1222 = vdwg.mxu0
        %v1223 = vsel %vm376, %v1217, -inf
        %1224 = vmax.xlane.f32.xlu0 %v1223
        %v1225 = vpop.xlane.xlu0 %1224
        %v1226 = vsel %vm376, %v1220, -inf
        %1227 = vmax.xlane.f32.xlu0 %v1226
        %v1228 = vpop.xlane.xlu0 %1227
        %v1229 = vsub.f32 %v1217, %v1225
        %v1230 = vsub.f32 %v1220, %v1228
        %v1231 = vmul.f32 %v1229, 1.442695
        %v1232 = vpow.pop %v1231
        %v1233 = vmul.f32 %v1230, 1.442695
        %v1234 = vpow.pop %v1233
        %v1235 = vsel %vm376, %v1232, 0.0
        %1236 = vadd.xlane.f32.xlu0 %v1235
        %v1237 = vpop.xlane.xlu0 %1236
        %v1238 = vsel %vm376, %v1234, 0.0
        %1239 = vadd.xlane.f32.xlu0 %v1238
        %v1240 = vpop.xlane.xlu0 %1239
        %v1241 = vrcp.pop %v1237
        %v1242 = vrcp.pop %v1240
        %v1243 = vmul.f32 %v1232, %v1241
        %v1244 = vmul.f32 %v1234, %v1242
        %v1245 = vpack.c.bf16 %v1244, %v1243
        %1246 = vrot.lane.b32.xlu0 %v324, 72
        %v1247 = vpop.permute.xlu0 %1246
        %v1250 = vsel %vm376, %v1245, 0
        %1252 = vmatprep.subr.bf16.mxu0 0
        %1253 = vmatpush1.bf16.msra.mxu0 %v1247
        %1254 = vmatprep.subr.bf16.mxu0 0
        %1255 = vmatpush1.bf16.msra.mxu0 0
        %1256 = vmatprep.subr.bf16.mxu0 0
        %1257 = vmatpush1.bf16.msra.mxu0 0
        %1258 = vmatprep.subr.bf16.mxu0 0
        %1259 = vmatpush1.bf16.msra.mxu0 0
        %1260 = vmatprep.subr.bf16.mxu0 0
        %1261 = vmatpush1.bf16.msra.mxu0 0
        %1262 = vmatprep.subr.bf16.mxu0 0
        %1263 = vmatpush1.bf16.msra.mxu0 0
        %1264 = vmatprep.subr.bf16.mxu0 0
        %1265 = vmatpush1.bf16.msra.mxu0 0
        %1266 = vmatprep.subr.bf16.mxu0 0
        %1267 = vmatpush1.bf16.msra.mxu0 0
        %1268 = vmatprep.subr.bf16.mxu0 0
        %1269 = vmatpush1.bf16.msra.mxu0 0
        %1270 = vmatprep.subr.bf16.mxu0 0
        %1271 = vmatpush1.bf16.msra.mxu0 0
        %1272 = vmatprep.subr.bf16.mxu0 0
        %1273 = vmatpush1.bf16.msra.mxu0 0
        %1274 = vmatprep.subr.bf16.mxu0 0
        %1275 = vmatpush1.bf16.msra.mxu0 0
        %1276 = vmatprep.subr.bf16.mxu0 0
        %1277 = vmatpush1.bf16.msra.mxu0 0
        %1278 = vmatprep.subr.bf16.mxu0 0
        %1279 = vmatpush1.bf16.msra.mxu0 0
        %1280 = vmatprep.subr.bf16.mxu0 0
        %1281 = vmatpush1.bf16.msra.mxu0 0
        %1282 = vmatprep.subr.bf16.mxu0 0
        %1283 = vmatpush1.bf16.msra.mxu0 0
        %1284 = vmatprep.mubr.bf16.mxu0 0
        %1285 = vmatmul.mubr.bf16.gmra.mrb[0].mxu0 %v1250
        %v1286 = vpop.f32.mrb[0].mxu0
        %v1287 = vadd.f32 0.0, %v1286
        %v1288 = vpop.f32.mrb[0].mxu0
        %v1289 = vpop.f32.mrb[0].mxu0
        %v1290 = vadd.f32 0.0, %v1289
        %v1291 = vpop.f32.mrb[0].mxu0
        %1292 = vdwg.mxu0
        %1295 = vrot.lane.b32.xlu0 %v561, 8
        %v1296 = vpop.permute.xlu0 %1295
        %1297 = vrot.lane.b32.xlu0 %v564, 8
        %v1298 = vpop.permute.xlu0 %1297
        %1303 = vrot.lane.b32.xlu0 %v682, 16
        %v1304 = vpop.permute.xlu0 %1303
        %1305 = vrot.lane.b32.xlu0 %v685, 16
        %v1306 = vpop.permute.xlu0 %1305
        %1311 = vrot.lane.b32.xlu0 %v803, 24
        %v1312 = vpop.permute.xlu0 %1311
        %1313 = vrot.lane.b32.xlu0 %v806, 24
        %v1314 = vpop.permute.xlu0 %1313
        %1319 = vrot.lane.b32.xlu0 %v924, 32
        %v1320 = vpop.permute.xlu0 %1319
        %1321 = vrot.lane.b32.xlu0 %v927, 32
        %v1322 = vpop.permute.xlu0 %1321
        %1327 = vrot.lane.b32.xlu0 %v1045, 40
        %v1328 = vpop.permute.xlu0 %1327
        %1329 = vrot.lane.b32.xlu0 %v1048, 40
        %v1330 = vpop.permute.xlu0 %1329
        %1335 = vrot.lane.b32.xlu0 %v1166, 48
        %v1336 = vpop.permute.xlu0 %1335
        %1337 = vrot.lane.b32.xlu0 %v1169, 48
        %v1338 = vpop.permute.xlu0 %1337
        %1343 = vrot.lane.b32.xlu0 %v1287, 56
        %v1344 = vpop.permute.xlu0 %1343
        %1345 = vrot.lane.b32.xlu0 %v1290, 56
        %v1346 = vpop.permute.xlu0 %1345
        %v1349 = vsel %vm328, %v438, %v1296
        %v1350 = vsel %vm328, %v441, %v1298
        %v1351 = vsel %vm376, %v1349, %v1304
        %v1352 = vsel %vm376, %v1350, %v1306
        %vm1353 = vcmask 195584
        %v1354 = vsel %vm1353, %v1351, %v1312
        %v1355 = vsel %vm1353, %v1352, %v1314
        %vm1356 = vcmask 261120
        %v1357 = vsel %vm1356, %v1354, %v1320
        %v1358 = vsel %vm1356, %v1355, %v1322
        %vm1359 = vcmask 326656
        %v1360 = vsel %vm1359, %v1357, %v1328
        %v1361 = vsel %vm1359, %v1358, %v1330
        %vm1362 = vcmask 392192
        %v1363 = vsel %vm1362, %v1360, %v1336
        %v1364 = vsel %vm1362, %v1361, %v1338
        %vm1365 = vcmask 457728
        %v1366 = vsel %vm1365, %v1363, %v1344
        %v1367 = vsel %vm1365, %v1364, %v1346
        %v1368 = vpack.c.bf16 %v1367, %v1366
        %v1369 = vld [vmem:[#allocation7] sm:$0xff]
        %v1370 = vld [vmem:[#allocation7 + $0x8] sm:$0xff]
        %v1371 = vld [vmem:[#allocation7 + $0x10] sm:$0xff]
        %v1372 = vld [vmem:[#allocation7 + $0x18] sm:$0xff]
        %v1373 = vld [vmem:[#allocation7 + $0x20] sm:$0xff]
        %v1374 = vld [vmem:[#allocation7 + $0x28] sm:$0xff]
        %v1375 = vld [vmem:[#allocation7 + $0x30] sm:$0xff]
        %v1376 = vld [vmem:[#allocation7 + $0x38] sm:$0xff]
        %v1377 = vpack.c.bf16 %v1370, %v1369
        %v1378 = vpack.c.bf16 %v1372, %v1371
        %v1379 = vpack.c.bf16 %v1374, %v1373
        %v1380 = vpack.c.bf16 %v1376, %v1375
        %v1381 = vld [vmem:[%s3] sm:$0x1]
        %v1383 = vlaneseq
        %v1384 = vshrl.u32 %v1383, 7
        %v1385 = vsub.s32 0, %v1384
        %v1386 = vrot.slane %v1381, %v1385
        %v1389 = vsel %vm273, %v1368, 0
        %1391 = vmatprep.subr.bf16.mxu0 0
        %1392 = vmatpush1.bf16.msra.mxu0 %v1377
        %1393 = vmatprep.subr.bf16.mxu0 0
        %1394 = vmatpush1.bf16.msra.mxu0 %v1378
        %1395 = vmatprep.subr.bf16.mxu0 0
        %1396 = vmatpush1.bf16.msra.mxu0 %v1379
        %1397 = vmatprep.subr.bf16.mxu0 0
        %1398 = vmatpush1.bf16.msra.mxu0 %v1380
        %1399 = vmatprep.subr.bf16.mxu0 0
        %1400 = vmatpush1.bf16.msra.mxu0 0
        %1401 = vmatprep.subr.bf16.mxu0 0
        %1402 = vmatpush1.bf16.msra.mxu0 0
        %1403 = vmatprep.subr.bf16.mxu0 0
        %1404 = vmatpush1.bf16.msra.mxu0 0
        %1405 = vmatprep.subr.bf16.mxu0 0
        %1406 = vmatpush1.bf16.msra.mxu0 0
        %1407 = vmatprep.subr.bf16.mxu0 0
        %1408 = vmatpush1.bf16.msra.mxu0 0
        %1409 = vmatprep.subr.bf16.mxu0 0
        %1410 = vmatpush1.bf16.msra.mxu0 0
        %1411 = vmatprep.subr.bf16.mxu0 0
        %1412 = vmatpush1.bf16.msra.mxu0 0
        %1413 = vmatprep.subr.bf16.mxu0 0
        %1414 = vmatpush1.bf16.msra.mxu0 0
        %1415 = vmatprep.subr.bf16.mxu0 0
        %1416 = vmatpush1.bf16.msra.mxu0 0
        %1417 = vmatprep.subr.bf16.mxu0 0
        %1418 = vmatpush1.bf16.msra.mxu0 0
        %1419 = vmatprep.subr.bf16.mxu0 0
        %1420 = vmatpush1.bf16.msra.mxu0 0
        %1421 = vmatprep.subr.bf16.mxu0 0
        %1422 = vmatpush1.bf16.msra.mxu0 0
        %1423 = vmatprep.mubr.bf16.mxu0 0
        %1424 = vmatmul.mubr.bf16.gmra.mrb[0].mxu0 %v1389
        %v1425 = vpop.f32.mrb[0].mxu0
        %v1426 = vadd.f32 %v1386, %v1425
        %v1427 = vpop.f32.mrb[0].mxu0
        %v1428 = vpop.f32.mrb[0].mxu0
        %v1429 = vadd.f32 %v1386, %v1428
        %v1430 = vpop.f32.mrb[0].mxu0
        %1431 = vdwg.mxu0
        %1432 = vst.msk [vmem:[%s244] sm:$0xff] %vm273, %v1426
        %1433 = vst.msk [vmem:[%s244 + $0x8] sm:$0xff] %vm273, %v1429
        %s1434 = sand.u32 %s119, 1
        %s1435 = scalar_lea.sflag [#allocation4], %s1434
        %s1436 = sand.u32 %s119, 1
        %s1437 = smul.addr %s1436, 16
        %s1438 = scalar_lea.vmem [#allocation8], %s1437
        // Predicated region
        $region49: #{attention_forward.1} parent=35 // pred_check
          %p1439 = pneg %p129
        $region50: #{attention_forward.1} parent=35 // pred_check_branch
          %1441 = sbr.rel (%p1439) target = $region52
        $region51: #{attention_forward.1} parent=35 // pred_region
          %s1443 = ssub.s32 256, 256
          %1444 = vsyncadd %s1435, %s1443
          %s1445 = smul.addr %s22, 2
          %s1446 = smul.addr %s1445, 128
          %s1447 = scalar_lea.hbm %s4, %s1446
          %s1448 = sshll.u32 %s1438, 4
          %s1449 = int_to_ptr.vmem [resolvable:$true] %s1448
          %1454 = dma.vmem_to_hbm [thread:$0]  %s1449, 256, %s1447, %s1435, 128, 128, 8
        $region52: #{attention_forward.1} parent=35 // pred_fallthru
          _
      $region36: #{attention_forward.1} parent=5 // pred_fallthru
        _
      %p1455 = scmp.le.s32.totalorder 2, %s17
      // Predicated region
      $region53: #{attention_forward.1} parent=5 // pred_check
        %p1456 = pneg %p1455
      $region54: #{attention_forward.1} parent=5 // pred_check_branch
        %1458 = sbr.rel (%p1456) target = $region56
      $region55: #{attention_forward.1} parent=5 // pred_region
        %s1459 = ssub.s32 %s17, 2
        // Predicated region
        $region57: #{attention_forward.1} parent=55 // pred_check
          %p1460 = pneg %p135
        $region58: #{attention_forward.1} parent=55 // pred_check_branch
          %1462 = sbr.rel (%p1460) target = $region60
        $region59: #{attention_forward.1} parent=55 // pred_region
          %s1463 = sand.u32 %s120, 1
          %s1464 = scalar_lea.sflag [#allocation4], %s1463
          %s1465 = sand.u32 %s120, 1
          %s1466 = smul.addr %s1465, 16
          %s1467 = scalar_lea.vmem [#allocation8], %s1466
          %1468 = dma.done %s1464, 256
        $region60: #{attention_forward.1} parent=55 // pred_fallthru
          _
      $region56: #{attention_forward.1} parent=5 // pred_fallthru
        _
    $region6: #{attention_forward.1} parent=1 // loop_footer
      %s21 = sadd.s32 1, %s17
    $region7: #{attention_forward.1} parent=1 // loop_footer_branch
      %16 = sbr.rel target = $region3
    $region8: #{attention_forward.1} parent=1 // loop_exit
      _
    %1469 = vsyncpa [#allocation3], 1
    %s1470 = scalar_lea.sflag [#allocation3], 1
    %1471 = vsyncpa %s1470, 1
    %1472 = vsyncpa [#allocation6], 1
    %1473 = vsyncpa [#allocation4], 1
    %s1474 = scalar_lea.sflag [#allocation4], 1
    %1475 = vsyncpa %s1474, 1

</llo_original>
